<compile_context>
chip_gen: v5e
topology: v5e:2x2
jax: 0.10.0
libtpu: 0.0.40
codegen_flags: <defaults>
</compile_context>

<pallas_src>
import functools
import math

import numpy as np
import jax
import jax.numpy as jnp
from jax.experimental import pallas as pl
from jax.experimental.pallas import tpu as pltpu

LANE = 128
OUT_PAD = 128   # lane width of the final output slab (folded Linear(10,1), padded)


def _rup(n, m=LANE):
    return ((n + m - 1) // m) * m


def _pad2(a, rows, cols):
    out = np.zeros((rows, cols), np.float32)
    out[: a.shape[0], : a.shape[1]] = a
    return out


# ----------------------------------------------------------------------------
# Build-time glue: conv / conv+pool layers as dense (Toeplitz) matrices.
# ----------------------------------------------------------------------------
def conv_to_matrix(w, b, cin, hin, win):
    """Conv2d (stride 1, no pad) as y_flat = x_flat @ A + bb (torch flatten order)."""
    cout, _, kh, kw = w.shape
    hout, wout = hin - kh + 1, win - kw + 1
    A = np.zeros((cin * hin * win, cout * hout * wout), np.float32)
    bb = np.zeros((1, cout * hout * wout), np.float32)
    for co in range(cout):
        for oy in range(hout):
            for ox in range(wout):
                o = (co * hout + oy) * wout + ox
                bb[0, o] = b[co]
                for ci in range(cin):
                    for ky in range(kh):
                        for kx in range(kw):
                            i = (ci * hin + oy + ky) * win + (ox + kx)
                            A[i, o] = w[co, ci, ky, kx]
    return A, bb, (cout, hout, wout)


def conv_pool_phase_matrices(w, b, cin, hin, win, p=2):
    """Fused Conv2d(k, stride 1) + MaxPool2d(p): y = max_d(x_flat @ A[d]) + bb.

    A[d] (d = dy*p + dx) is the conv Toeplitz matrix restricted to pooling-window
    offset (dy, dx); the max over the p*p phases IS the max-pool (bias is shared
    across phases so adding it after the max is exact).
    """
    cout, _, kh, kw = w.shape
    hc, wc = hin - kh + 1, win - kw + 1          # conv output
    hp, wp = hc // p, wc // p                    # pooled output (floor, like torch)
    A = np.zeros((p * p, cin * hin * win, cout * hp * wp), np.float32)
    bb = np.zeros((1, cout * hp * wp), np.float32)
    for co in range(cout):
        for oy in range(hp):
            for ox in range(wp):
                o = (co * hp + oy) * wp + ox
                bb[0, o] = b[co]
                for dy in range(p):
                    for dx in range(p):
                        d = dy * p + dx
                        for ci in range(cin):
                            for ky in range(kh):
                                for kx in range(kw):
                                    i = (ci * hin + p * oy + dy + ky) * win + (p * ox + dx + kx)
                                    A[d, i, o] = w[co, ci, ky, kx]
    return A, bb, (cout, hp, wp)


# ----------------------------------------------------------------------------
# Pallas kernels.
# ----------------------------------------------------------------------------
def _pop_gate_kernel(pop_ref, pw_ref, pb_ref, g_ref):
    # pop_seq with its two Linears folded at build time (Dropout == identity):
    #   g = sigmoid(pop @ (pw1 @ pw2) + (pb1 @ pw2 + pb2))
    h = jnp.dot(pop_ref[...], pw_ref[...], preferred_element_type=jnp.float32)
    g_ref[...] = 1.0 / (1.0 + jnp.exp(-(h + pb_ref[...])))


def _net_kernel(x_ref, g_ref,
                a1_ref, b1_ref, a2_ref, b2_ref, a3_ref, b3_ref,
                lw_ref, lb_ref, out_ref):
    dot = functools.partial(jnp.dot, preferred_element_type=jnp.float32)
    bf16 = jnp.bfloat16
    ph1 = a1_ref.shape[1] // 4          # 128-aligned per-phase width, stage 1
    ph2 = a2_ref.shape[1] // 4          # 128-aligned per-phase width, stage 2

    # --- conv branch: (Conv2d -> MaxPool2d) stages, each as ONE wide matmul ---
    # --- followed by a VPU max over the four 128-aligned phase slices.      ---
    x = x_ref[...]                                       # (tm, SAMPLES) bf16
    h1c = dot(x, a1_ref[...])                            # (tm, 4*ph1) f32
    h1 = h1c[:, :ph1]
    for d in range(1, 4):
        h1 = jnp.maximum(h1, h1c[:, d * ph1:(d + 1) * ph1])
    h1 = (h1 + b1_ref[...]).astype(bf16)                 # (tm, ph1), padded cols stay 0

    h2c = dot(h1, a2_ref[...])                           # (tm, 4*ph2) f32
    h2 = h2c[:, :ph2]
    for d in range(1, 4):
        h2 = jnp.maximum(h2, h2c[:, d * ph2:(d + 1) * ph2])
    h2 = (h2 + b2_ref[...]).astype(bf16)                 # (tm, ph2)

    feat = dot(h2, a3_ref[...]) + b3_ref[...]            # Conv2d(5,10,2x2) -> (tm, F_PAD)

    # --- merge with the precomputed, row-replicated population gate, then the ---
    # --- folded lin_seq (Linear(final,10)+Linear(10,1)) as ONE matmul.        ---
    z = (feat * g_ref[...]).astype(bf16)
    out_ref[...] = dot(z, lw_ref[...]) + lb_ref[...]     # (tm, OUT_PAD) lane-dense slab


# ----------------------------------------------------------------------------
# Parameter init (deterministic, PyTorch-style U(+-1/sqrt(fan_in))) + operands.
# ----------------------------------------------------------------------------
def build_net_operands(key, num_samples, width):
    assert num_samples % width == 0, "width must divide num_samples exactly"
    height = num_samples // width
    ks = jax.random.split(key, 14)

    def u(k, shape, fan_in):
        bound = 1.0 / np.sqrt(float(fan_in))
        return np.asarray(jax.random.uniform(k, shape, jnp.float32, -bound, bound))

    # conv stack weights (same shapes as the PyTorch module)
    w1, b1 = u(ks[0], (3, 1, 2, 2), 1 * 4), u(ks[1], (3,), 1 * 4)
    w2, b2 = u(ks[2], (5, 3, 2, 2), 3 * 4), u(ks[3], (5,), 3 * 4)
    w3, b3 = u(ks[4], (10, 5, 2, 2), 5 * 4), u(ks[5], (10,), 5 * 4)

    A1, bb1, (c1, hp1, wp1) = conv_pool_phase_matrices(w1, b1, 1, width, height)
    A2, bb2, (c2, hp2, wp2) = conv_pool_phase_matrices(w2, b2, 3, hp1, wp1)
    A3, bb3, (c3, h3, w3s) = conv_to_matrix(w3, b3, 5, hp2, wp2)
    ph1, ph2, final = c1 * hp1 * wp1, c2 * hp2 * wp2, c3 * h3 * w3s
    ph1_p, ph2_p, f_p = _rup(ph1), _rup(ph2), _rup(final)

    # Concatenate the 4 pooling phases along the output axis, each phase padded
    # to a multiple of 128 lanes; pad every feature dim (rows & cols) to 128.
    A1cat = np.concatenate([_pad2(A1[d], num_samples, ph1_p) for d in range(4)], axis=1)
    A2cat = np.concatenate([_pad2(A2[d], ph1_p, ph2_p) for d in range(4)], axis=1)
    A3p = _pad2(A3, ph2_p, f_p)
    bb1p, bb2p, bb3p = _pad2(bb1, 1, ph1_p), _pad2(bb2, 1, ph2_p), _pad2(bb3, 1, f_p)

    half = num_samples // 2
    # pop_seq: Linear(samples, half) -> Dropout(id) -> Linear(half, final) -> Sigmoid.
    # Fold the two Linears at build time (eliminates the SAMPLES^2/2 resident weight).
    pw1 = u(ks[6], (num_samples, half), num_samples)
    pb1 = u(ks[7], (1, half), num_samples)
    pw2 = u(ks[8], (half, final), half)
    pb2 = u(ks[9], (1, final), half)
    pw_fold = _pad2(pw1 @ pw2, num_samples, f_p)
    pb_fold = _pad2(pb1 @ pw2 + pb2, 1, f_p)

    # lin_seq: Linear(final, 10) -> Dropout(id) -> Linear(10, 1), folded too.
    lw1 = u(ks[10], (final, 10), final)
    lb1 = u(ks[11], (1, 10), final)
    lw2 = u(ks[12], (10, 1), 10)
    lb2 = u(ks[13], (1, 1), 10)
    lw12 = _pad2(lw1 @ lw2, f_p, OUT_PAD)          # only column 0 is meaningful
    lb12 = _pad2(lb1 @ lw2 + lb2, 1, OUT_PAD)

    bf16, f32 = jnp.bfloat16, jnp.float32
    ops = (
        jnp.asarray(A1cat, bf16), jnp.asarray(bb1p, f32),
        jnp.asarray(A2cat, bf16), jnp.asarray(bb2p, f32),
        jnp.asarray(A3p, bf16), jnp.asarray(bb3p, f32),
        jnp.asarray(pw_fold, bf16), jnp.asarray(pb_fold, f32),
        jnp.asarray(lw12, bf16), jnp.asarray(lb12, f32),
    )
    return ops, final


# ----------------------------------------------------------------------------
# Wrapper: reshape glue + pallas_calls (jitted).
# ----------------------------------------------------------------------------
@jax.jit
def net_forward(x, pop, ops):
    B, SNP, SAMPLES = x.shape
    N = B * SNP
    (a1, b1, a2, b2, a3, b3, pwf, pbf, lw, lb) = ops
    F_PAD = pwf.shape[1]

    ximg = x.reshape(N, SAMPLES).astype(jnp.bfloat16)    # torch flatten order (b*SNP + s)
    popf = pop.reshape(B, SAMPLES).astype(jnp.bfloat16)

    # Population gate: computed ONCE (hoisted out of the row-tiled grid).
    g = pl.pallas_call(
        _pop_gate_kernel,
        out_shape=jax.ShapeDtypeStruct((B, F_PAD), jnp.float32),
    )(popf, pwf, pbf)
    # pop.repeat(SNP, 1): row r of the gate is g[r % B] -- pure broadcast, no MXU.
    g_rep = jnp.tile(g, (SNP, 1))                        # (N, F_PAD) f32

    # Row tiling: large tiles (per-step overhead bound), and >=2 grid steps when
    # possible so dimension_semantics=("parallel",) can use both v7x TensorCores.
    if N <= 8:
        tile_m = N
    else:
        tile_m = min(1024, max(8, ((pl.cdiv(N, 2) + 7) // 8) * 8))
    grid = (pl.cdiv(N, tile_m),)

    def row_spec(cols):
        return pl.BlockSpec((tile_m, cols), lambda i: (i, 0))

    def const_spec(a):       # whole array, VMEM-resident across all grid steps
        return pl.BlockSpec(a.shape, lambda i: (0, 0))

    weights = (a1, b1, a2, b2, a3, b3, lw, lb)
    in_specs = [row_spec(SAMPLES), row_spec(F_PAD)] + [const_spec(w) for w in weights]

    # Explicit VMEM budget: double-buffered constants + tile I/O + f32 intermediates.
    const_bytes = sum(math.prod(w.shape) * w.dtype.itemsize for w in weights)
    tile_bytes = tile_m * (SAMPLES * 2 + F_PAD * 4 + OUT_PAD * 4)
    act_bytes = tile_m * (a1.shape[1] + a2.shape[1] + 2 * F_PAD) * 4
    vmem_limit = int(min(64 << 20, max(32 << 20, 2 * (const_bytes + tile_bytes) + act_bytes)))

    out = pl.pallas_call(
        _net_kernel,
        out_shape=jax.ShapeDtypeStruct((N, OUT_PAD), jnp.float32),
        grid=grid,
        in_specs=in_specs,
        out_specs=pl.BlockSpec((tile_m, OUT_PAD), lambda i: (i, 0)),
        compiler_params=pltpu.CompilerParams(
            dimension_semantics=("parallel",),
            vmem_limit_bytes=vmem_limit),
    )(ximg, g_rep, *weights)
    return out[:, 0].reshape(B, SNP)


# ----------------------------------------------------------------------------
# Pure-JAX reference (same folded/padded operands, same op order & dtypes).
# ----------------------------------------------------------------------------
def net_reference(x, pop, ops):
    (a1, b1, a2, b2, a3, b3, pwf, pbf, lw, lb) = ops
    B, SNP, SAMPLES = x.shape
    N = B * SNP
    bf16 = jnp.bfloat16
    dot = functools.partial(jnp.dot, preferred_element_type=jnp.float32)
    ximg = x.reshape(N, SAMPLES).astype(bf16)
    popf = pop.reshape(B, SAMPLES).astype(bf16)
    ph1, ph2 = a1.shape[1] // 4, a2.shape[1] // 4

    h1c = dot(ximg, a1)
    h1 = h1c[:, :ph1]
    for d in range(1, 4):
        h1 = jnp.maximum(h1, h1c[:, d * ph1:(d + 1) * ph1])
    h1 = (h1 + b1).astype(bf16)
    h2c = dot(h1, a2)
    h2 = h2c[:, :ph2]
    for d in range(1, 4):
        h2 = jnp.maximum(h2, h2c[:, d * ph2:(d + 1) * ph2])
    h2 = (h2 + b2).astype(bf16)
    feat = dot(h2, a3) + b3

    g = 1.0 / (1.0 + jnp.exp(-(dot(popf, pwf) + pbf)))
    g_rep = jnp.tile(g, (SNP, 1))
    z = (feat * g_rep).astype(bf16)
    o = dot(z, lw) + lb
    return o[:, 0].reshape(B, SNP)


# ----------------------------------------------------------------------------
if __name__ == "__main__":
    BATCH, SNP, WIDTH, SAMPLES = 2, 4, 16, 256     # height = SAMPLES // WIDTH = 16

    key = jax.random.PRNGKey(0)
    kx, kp, kw = jax.random.split(key, 3)
    x = jax.random.uniform(kx, (BATCH, SNP, SAMPLES), jnp.float32)
    pop = jax.random.uniform(kp, (BATCH, SAMPLES), jnp.float32)

    ops, final = build_net_operands(kw, SAMPLES, WIDTH)   # final == 40

    out = net_forward(x, pop, ops)
    jax.block_until_ready(out)
    assert out.shape == (BATCH, SNP)
    assert bool(jnp.all(jnp.isfinite(out)))

    # correctness check against a pure-JAX reference using the same operands
    ref = net_reference(x, pop, ops)
    err = float(jnp.max(jnp.abs(out - ref)))
    assert err < 2e-2, f"mismatch vs reference: max|diff|={err}"

    print("KERNEL_OK")
</pallas_src>

<mosaic_0001>
module attributes {stable_mosaic.version = 11 : i64} {
  func.func @_pop_gate_kernel(%arg0: memref<2x256xbf16, #tpu.memory_space<vmem>>, %arg1: memref<256x128xbf16, #tpu.memory_space<vmem>>, %arg2: memref<1x128xf32, #tpu.memory_space<vmem>>, %arg3: memref<2x128xf32, #tpu.memory_space<vmem>>) attributes {dimension_semantics = [], scalar_prefetch = 0 : i64, scratch_operands = 0 : i64, tpu.core_type = #tpu.core_type<tc>} {
    %c0 = arith.constant 0 : index
    %c0_0 = arith.constant 0 : index
    %0 = vector.load %arg0[%c0, %c0_0] : memref<2x256xbf16, #tpu.memory_space<vmem>>, vector<2x256xbf16>
    %c0_1 = arith.constant 0 : index
    %c0_2 = arith.constant 0 : index
    %1 = vector.load %arg1[%c0_1, %c0_2] : memref<256x128xbf16, #tpu.memory_space<vmem>>, vector<256x128xbf16>
    %cst = arith.constant dense<0.000000e+00> : vector<2x128xf32>
    %2 = tpu.matmul %0, %1, %cst {dimension_numbers = #tpu.dot_dimension_numbers<[1], [0], [0], [1], [0, 0, 1, 1], [], []>} : vector<2x256xbf16>, vector<256x128xbf16>, vector<2x128xf32> -> vector<2x128xf32>
    %c0_3 = arith.constant 0 : index
    %c0_4 = arith.constant 0 : index
    %3 = vector.load %arg2[%c0_3, %c0_4] : memref<1x128xf32, #tpu.memory_space<vmem>>, vector<1x128xf32>
    %4 = vector.broadcast %3 : vector<1x128xf32> to vector<2x128xf32>
    %5 = arith.addf %2, %4 : vector<2x128xf32>
    %cst_5 = arith.constant 0.000000e+00 : f32
    %6 = vector.broadcast %cst_5 : f32 to vector<2x128xf32>
    %7 = arith.subf %6, %5 : vector<2x128xf32>
    %8 = math.exp %7 : vector<2x128xf32>
    %cst_6 = arith.constant 1.000000e+00 : f32
    %9 = vector.broadcast %cst_6 : f32 to vector<2x128xf32>
    %10 = arith.addf %9, %8 : vector<2x128xf32>
    %cst_7 = arith.constant 1.000000e+00 : f32
    %11 = vector.broadcast %cst_7 : f32 to vector<2x128xf32>
    %12 = arith.divf %11, %10 : vector<2x128xf32>
    %c0_8 = arith.constant 0 : index
    %c0_9 = arith.constant 0 : index
    %13 = vector.load %arg3[%c0_8, %c0_9] : memref<2x128xf32, #tpu.memory_space<vmem>>, vector<2x128xf32>
    tpu.vector_store %arg3[%c0_8, %c0_9], %12 {strides = array<i32>} : memref<2x128xf32, #tpu.memory_space<vmem>>, vector<2x128xf32>,
    return
  }
}

module attributes {stable_mosaic.version = 11 : i64} {
  func.func @_net_kernel(%arg0: i32, %arg1: memref<8x256xbf16, #tpu.memory_space<vmem>>, %arg2: memref<8x128xf32, #tpu.memory_space<vmem>>, %arg3: memref<256x1024xbf16, #tpu.memory_space<vmem>>, %arg4: memref<1x256xf32, #tpu.memory_space<vmem>>, %arg5: memref<256x512xbf16, #tpu.memory_space<vmem>>, %arg6: memref<1x128xf32, #tpu.memory_space<vmem>>, %arg7: memref<128x128xbf16, #tpu.memory_space<vmem>>, %arg8: memref<1x128xf32, #tpu.memory_space<vmem>>, %arg9: memref<128x128xbf16, #tpu.memory_space<vmem>>, %arg10: memref<1x128xf32, #tpu.memory_space<vmem>>, %arg11: memref<8x128xf32, #tpu.memory_space<vmem>>) attributes {dimension_semantics = [#tpu.dimension_semantics<parallel>], iteration_bounds = array<i64: 1>, scalar_prefetch = 0 : i64, scratch_operands = 0 : i64, tpu.core_type = #tpu.core_type<tc>, window_params = [{transform_indices = @transform_0, window_bounds = array<i64: 8, 256>}, {transform_indices = @transform_1, window_bounds = array<i64: 8, 128>}, {pipeline_mode = #tpu.pipeline_mode<synchronous>, transform_indices = @transform_2, window_bounds = array<i64: 256, 1024>}, {pipeline_mode = #tpu.pipeline_mode<synchronous>, transform_indices = @transform_3, window_bounds = array<i64: 1, 256>}, {pipeline_mode = #tpu.pipeline_mode<synchronous>, transform_indices = @transform_4, window_bounds = array<i64: 256, 512>}, {pipeline_mode = #tpu.pipeline_mode<synchronous>, transform_indices = @transform_5, window_bounds = array<i64: 1, 128>}, {pipeline_mode = #tpu.pipeline_mode<synchronous>, transform_indices = @transform_6, window_bounds = array<i64: 128, 128>}, {pipeline_mode = #tpu.pipeline_mode<synchronous>, transform_indices = @transform_7, window_bounds = array<i64: 1, 128>}, {pipeline_mode = #tpu.pipeline_mode<synchronous>, transform_indices = @transform_8, window_bounds = array<i64: 128, 128>}, {pipeline_mode = #tpu.pipeline_mode<synchronous>, transform_indices = @transform_9, window_bounds = array<i64: 1, 128>}, {transform_indices = @transform_10, window_bounds = array<i64: 8, 128>}]} {
    %c0 = arith.constant 0 : index
    %c0_0 = arith.constant 0 : index
    %0 = vector.load %arg1[%c0, %c0_0] : memref<8x256xbf16, #tpu.memory_space<vmem>>, vector<8x256xbf16>
    %c0_1 = arith.constant 0 : index
    %c0_2 = arith.constant 0 : index
    %1 = vector.load %arg3[%c0_1, %c0_2] : memref<256x1024xbf16, #tpu.memory_space<vmem>>, vector<256x1024xbf16>
    %cst = arith.constant dense<0.000000e+00> : vector<8x1024xf32>
    %2 = tpu.matmul %0, %1, %cst {dimension_numbers = #tpu.dot_dimension_numbers<[1], [0], [0], [1], [0, 0, 1, 1], [], []>} : vector<8x256xbf16>, vector<256x1024xbf16>, vector<8x1024xf32> -> vector<8x1024xf32>
    %3 = vector.extract_strided_slice %2 {offsets = [0, 0], sizes = [8, 256], strides = [1, 1]} : vector<8x1024xf32> to vector<8x256xf32>
    %4 = vector.extract_strided_slice %2 {offsets = [0, 256], sizes = [8, 256], strides = [1, 1]} : vector<8x1024xf32> to vector<8x256xf32>
    %5 = arith.maximumf %3, %4 : vector<8x256xf32>
    %6 = vector.extract_strided_slice %2 {offsets = [0, 512], sizes = [8, 256], strides = [1, 1]} : vector<8x1024xf32> to vector<8x256xf32>
    %7 = arith.maximumf %5, %6 : vector<8x256xf32>
    %8 = vector.extract_strided_slice %2 {offsets = [0, 768], sizes = [8, 256], strides = [1, 1]} : vector<8x1024xf32> to vector<8x256xf32>
    %9 = arith.maximumf %7, %8 : vector<8x256xf32>
    %c0_3 = arith.constant 0 : index
    %c0_4 = arith.constant 0 : index
    %10 = vector.load %arg4[%c0_3, %c0_4] : memref<1x256xf32, #tpu.memory_space<vmem>>, vector<1x256xf32>
    %11 = vector.broadcast %10 : vector<1x256xf32> to vector<8x256xf32>
    %12 = arith.addf %9, %11 : vector<8x256xf32>
    %13 = arith.truncf %12 : vector<8x256xf32> to vector<8x256xbf16>
    %c0_5 = arith.constant 0 : index
    %c0_6 = arith.constant 0 : index
    %14 = vector.load %arg5[%c0_5, %c0_6] : memref<256x512xbf16, #tpu.memory_space<vmem>>, vector<256x512xbf16>
    %cst_7 = arith.constant dense<0.000000e+00> : vector<8x512xf32>
    %15 = tpu.matmul %13, %14, %cst_7 {dimension_numbers = #tpu.dot_dimension_numbers<[1], [0], [0], [1], [0, 0, 1, 1], [], []>} : vector<8x256xbf16>, vector<256x512xbf16>, vector<8x512xf32> -> vector<8x512xf32>
    %16 = vector.extract_strided_slice %15 {offsets = [0, 0], sizes = [8, 128], strides = [1, 1]} : vector<8x512xf32> to vector<8x128xf32>
    %17 = vector.extract_strided_slice %15 {offsets = [0, 128], sizes = [8, 128], strides = [1, 1]} : vector<8x512xf32> to vector<8x128xf32>
    %18 = arith.maximumf %16, %17 : vector<8x128xf32>
    %19 = vector.extract_strided_slice %15 {offsets = [0, 256], sizes = [8, 128], strides = [1, 1]} : vector<8x512xf32> to vector<8x128xf32>
    %20 = arith.maximumf %18, %19 : vector<8x128xf32>
    %21 = vector.extract_strided_slice %15 {offsets = [0, 384], sizes = [8, 128], strides = [1, 1]} : vector<8x512xf32> to vector<8x128xf32>
    %22 = arith.maximumf %20, %21 : vector<8x128xf32>
    %c0_8 = arith.constant 0 : index
    %c0_9 = arith.constant 0 : index
    %23 = vector.load %arg6[%c0_8, %c0_9] : memref<1x128xf32, #tpu.memory_space<vmem>>, vector<1x128xf32>
    %24 = vector.broadcast %23 : vector<1x128xf32> to vector<8x128xf32>
    %25 = arith.addf %22, %24 : vector<8x128xf32>
    %26 = arith.truncf %25 : vector<8x128xf32> to vector<8x128xbf16>
    %c0_10 = arith.constant 0 : index
    %c0_11 = arith.constant 0 : index
    %27 = vector.load %arg7[%c0_10, %c0_11] : memref<128x128xbf16, #tpu.memory_space<vmem>>, vector<128x128xbf16>
    %cst_12 = arith.constant dense<0.000000e+00> : vector<8x128xf32>
    %28 = tpu.matmul %26, %27, %cst_12 {dimension_numbers = #tpu.dot_dimension_numbers<[1], [0], [0], [1], [0, 0, 1, 1], [], []>} : vector<8x128xbf16>, vector<128x128xbf16>, vector<8x128xf32> -> vector<8x128xf32>
    %c0_13 = arith.constant 0 : index
    %c0_14 = arith.constant 0 : index
    %29 = vector.load %arg8[%c0_13, %c0_14] : memref<1x128xf32, #tpu.memory_space<vmem>>, vector<1x128xf32>
    %30 = vector.broadcast %29 : vector<1x128xf32> to vector<8x128xf32>
    %31 = arith.addf %28, %30 : vector<8x128xf32>
    %c0_15 = arith.constant 0 : index
    %c0_16 = arith.constant 0 : index
    %32 = vector.load %arg2[%c0_15, %c0_16] : memref<8x128xf32, #tpu.memory_space<vmem>>, vector<8x128xf32>
    %33 = arith.mulf %31, %32 : vector<8x128xf32>
    %34 = arith.truncf %33 : vector<8x128xf32> to vector<8x128xbf16>
    %c0_17 = arith.constant 0 : index
    %c0_18 = arith.constant 0 : index
    %35 = vector.load %arg9[%c0_17, %c0_18] : memref<128x128xbf16, #tpu.memory_space<vmem>>, vector<128x128xbf16>
    %cst_19 = arith.constant dense<0.000000e+00> : vector<8x128xf32>
    %36 = tpu.matmul %34, %35, %cst_19 {dimension_numbers = #tpu.dot_dimension_numbers<[1], [0], [0], [1], [0, 0, 1, 1], [], []>} : vector<8x128xbf16>, vector<128x128xbf16>, vector<8x128xf32> -> vector<8x128xf32>
    %c0_20 = arith.constant 0 : index
    %c0_21 = arith.constant 0 : index
    %37 = vector.load %arg10[%c0_20, %c0_21] : memref<1x128xf32, #tpu.memory_space<vmem>>, vector<1x128xf32>
    %38 = vector.broadcast %37 : vector<1x128xf32> to vector<8x128xf32>
    %39 = arith.addf %36, %38 : vector<8x128xf32>
    %c0_22 = arith.constant 0 : index
    %c0_23 = arith.constant 0 : index
    %40 = vector.load %arg11[%c0_22, %c0_23] : memref<8x128xf32, #tpu.memory_space<vmem>>, vector<8x128xf32>
    tpu.vector_store %arg11[%c0_22, %c0_23], %39 {strides = array<i32>} : memref<8x128xf32, #tpu.memory_space<vmem>>, vector<8x128xf32>,
    return
  }
  func.func @transform_0(%arg0: i32) -> (i32, i32) {
    %c0_i32 = arith.constant 0 : i32
    %c0_i32_0 = arith.constant 0 : i32
    return %arg0, %c0_i32 : i32, i32
  }
  func.func @transform_1(%arg0: i32) -> (i32, i32) {
    %c0_i32 = arith.constant 0 : i32
    %c0_i32_0 = arith.constant 0 : i32
    return %arg0, %c0_i32 : i32, i32
  }
  func.func @transform_2(%arg0: i32) -> (i32, i32) {
    %c0_i32 = arith.constant 0 : i32
    %c0_i32_0 = arith.constant 0 : i32
    %c0_i32_1 = arith.constant 0 : i32
    return %c0_i32, %c0_i32_0 : i32, i32
  }
  func.func @transform_3(%arg0: i32) -> (i32, i32) {
    %c0_i32 = arith.constant 0 : i32
    %c0_i32_0 = arith.constant 0 : i32
    %c0_i32_1 = arith.constant 0 : i32
    return %c0_i32, %c0_i32_0 : i32, i32
  }
  func.func @transform_4(%arg0: i32) -> (i32, i32) {
    %c0_i32 = arith.constant 0 : i32
    %c0_i32_0 = arith.constant 0 : i32
    %c0_i32_1 = arith.constant 0 : i32
    return %c0_i32, %c0_i32_0 : i32, i32
  }
  func.func @transform_5(%arg0: i32) -> (i32, i32) {
    %c0_i32 = arith.constant 0 : i32
    %c0_i32_0 = arith.constant 0 : i32
    %c0_i32_1 = arith.constant 0 : i32
    return %c0_i32, %c0_i32_0 : i32, i32
  }
  func.func @transform_6(%arg0: i32) -> (i32, i32) {
    %c0_i32 = arith.constant 0 : i32
    %c0_i32_0 = arith.constant 0 : i32
    %c0_i32_1 = arith.constant 0 : i32
    return %c0_i32, %c0_i32_0 : i32, i32
  }
  func.func @transform_7(%arg0: i32) -> (i32, i32) {
    %c0_i32 = arith.constant 0 : i32
    %c0_i32_0 = arith.constant 0 : i32
    %c0_i32_1 = arith.constant 0 : i32
    return %c0_i32, %c0_i32_0 : i32, i32
  }
  func.func @transform_8(%arg0: i32) -> (i32, i32) {
    %c0_i32 = arith.constant 0 : i32
    %c0_i32_0 = arith.constant 0 : i32
    %c0_i32_1 = arith.constant 0 : i32
    return %c0_i32, %c0_i32_0 : i32, i32
  }
  func.func @transform_9(%arg0: i32) -> (i32, i32) {
    %c0_i32 = arith.constant 0 : i32
    %c0_i32_0 = arith.constant 0 : i32
    %c0_i32_1 = arith.constant 0 : i32
    return %c0_i32, %c0_i32_0 : i32, i32
  }
  func.func @transform_10(%arg0: i32) -> (i32, i32) {
    %c0_i32 = arith.constant 0 : i32
    %c0_i32_0 = arith.constant 0 : i32
    return %arg0, %c0_i32 : i32, i32
  }
}

</mosaic_0001>

<llo_original>
// kernel: squeeze.1
$region0: #{squeeze.1}
  %s0 = inlined_call_operand.vmem [shape: f32[8], index: 0, kind: input, shape index: {}]
  %s1 = inlined_call_operand.hbm [shape: f32[2,4], index: 1, kind: output, shape index: {}]
  $region1: #{squeeze.1} parent=0
    #allocation0 [shape = 'u8[1024]{0}', space=vmem, size = 0x400, scoped, tag = 'operand span for operand 1']
    #allocation1 [shape = 's32[1]{0}', space=sflag, size = 0x4, scoped, tag = 'scoped memory for squeeze.1']
    #allocation2 [shape = 'u8[4096]{0}', space=vmem, size = 0x1000, scoped, tag = 'scoped mem for output reshape']
    #allocation3 [shape = 'u8[4096]{0}', space=vmem, size = 0x1000, scoped, tag = 'scoped mem for input reshape']
    %2 = vsyncpa [#allocation1], 0
    %s4 = ssub.s32 2, 1
    %v5 = vld [vmem:[%s0] sm:%s4]
    %6 = vst [vmem:[#allocation3] sm:%s4] %v5
    %v7 = vld [vmem:[#allocation3] sm:$0x1]
    %vm8 = vcmask 31744
    %9 = vst.msk [vmem:[#allocation2] sm:$0x1] %vm8, %v7
    %v10 = vld [vmem:[#allocation3] sm:$0x1]
    %11 = vrot.lane.b32.xlu0 %v10, 124
    %v12 = vpop.permute.xlu0 %11
    %vm13 = vcmask 31744
    %s14 = scalar_lea.vmem [#allocation2], 1
    %15 = vst.msk [vmem:[%s14] sm:$0x1] %vm13, %v12
    %s17 = ssub.s32 4, 1
    %v18 = vld [vmem:[#allocation2] sm:%s17]
    %s20 = ssub.s32 4, 1
    %21 = vst [vmem:[#allocation0] sm:%s20] %v18
    %23 = vsyncadd [#allocation1], 0
    %s25 = sshll.u32 [#allocation0], 4
    %s26 = int_to_ptr.vmem [resolvable:$true] %s25
    %s27 = sshll.u32 %s1, 4
    %s28 = int_to_ptr.hbm [resolvable:$true] %s27
    %30 = dma.vmem_to_hbm [thread:$0]  %s26, 32, %s28, [#allocation1]
    %32 = dma.done [#allocation1], 32
    %33 = vsyncpa [#allocation1], 1

// kernel: net_forward.2
$region0: #{net_forward.2}
  #allocation0 [shape = 'u32[]', space=smem, size = 0x4, offset = 0x4, fixed_abs, tag = 'smem constant byte address 0x4 - core index']
  #allocation1 [shape = 'u32[72,128]{1,0:T(1,128)}', space=vmem, size = 0x9000, scoped, tag = 'internal scratch']
  %s0 = inlined_call_operand.vmem [shape: bf16[2,256], index: 0, kind: input, shape index: {}]
  %s1 = inlined_call_operand.hbm [shape: bf16[256,128], index: 1, kind: input, shape index: {}]
  %s2 = inlined_call_operand.vmem [shape: f32[1,128], index: 2, kind: input, shape index: {}]
  %s3 = inlined_call_operand.vmem [shape: f32[2,128], index: 3, kind: output, shape index: {}]
  %s4 = sld [smem:[#allocation0]]
  $region26: #{net_forward.2} parent=0
    _
  %s6 = ssub.s32 1, %s4
  %s7 = scalar_select 0, %s6, %s4
  $region1: #{net_forward.2} parent=0
    #allocation2 [shape = 'u8[65536]{0}', space=vmem, size = 0x10000, scoped, tag = 'input window, operand 1, single buffered']
    #allocation3 [shape = 's32[1]{0}', space=sflag, size = 0x4, scoped, tag = 'scoped memory for net_forward.2']
    %8 = vsyncpa [#allocation3], 0
    // Predicated region
    $region2: #{net_forward.2} parent=1 // pred_check
      _
    $region3: #{net_forward.2} parent=1 // pred_check_branch
      %10 = sbr.rel (0) target = $region5
    $region4: #{net_forward.2} parent=1 // pred_region
      _
    $region5: #{net_forward.2} parent=1 // pred_fallthru
      _
    // Predicated region
    $region6: #{net_forward.2} parent=1 // pred_check
      _
    $region7: #{net_forward.2} parent=1 // pred_check_branch
      %12 = sbr.rel (0) target = $region9
    $region8: #{net_forward.2} parent=1 // pred_region
      %14 = vsyncadd [#allocation3], 0
      %s15 = sshll.u32 %s1, 4
      %s16 = int_to_ptr.hbm [resolvable:$true] %s15
      %s17 = sshll.u32 [#allocation2], 4
      %s18 = int_to_ptr.vmem [resolvable:$true] %s17
      %23 = dma.hbm_to_vmem [thread:$0]  %s16, 2048, %s18, [#allocation3], 64, 64, 4
    $region9: #{net_forward.2} parent=1 // pred_fallthru
      _
    // Predicated region
    $region10: #{net_forward.2} parent=1 // pred_check
      _
    $region11: #{net_forward.2} parent=1 // pred_check_branch
      %25 = sbr.rel (0) target = $region13
    $region12: #{net_forward.2} parent=1 // pred_region
      _
    $region13: #{net_forward.2} parent=1 // pred_fallthru
      _
    // Predicated region
    $region14: #{net_forward.2} parent=1 // pred_check
      _
    $region15: #{net_forward.2} parent=1 // pred_check_branch
      %27 = sbr.rel (0) target = $region17
    $region16: #{net_forward.2} parent=1 // pred_region
      %29 = dma.done [#allocation3], 2048
    $region17: #{net_forward.2} parent=1 // pred_fallthru
      _
    %v30 = vld [vmem:[%s0] sm:$0x3]
    %v31 = vld [vmem:[#allocation2] sm:$0xf]
    %v32 = vld [vmem:[#allocation2 + $0x4] sm:$0xf]
    %v33 = vld [vmem:[#allocation2 + $0x8] sm:$0xf]
    %v34 = vld [vmem:[#allocation2 + $0xc] sm:$0xf]
    %v35 = vld [vmem:[#allocation2 + $0x10] sm:$0xf]
    %v36 = vld [vmem:[#allocation2 + $0x14] sm:$0xf]
    %v37 = vld [vmem:[#allocation2 + $0x18] sm:$0xf]
    %v38 = vld [vmem:[#allocation2 + $0x1c] sm:$0xf]
    %v39 = vld [vmem:[#allocation2 + $0x20] sm:$0xf]
    %v40 = vld [vmem:[#allocation2 + $0x24] sm:$0xf]
    %v41 = vld [vmem:[#allocation2 + $0x28] sm:$0xf]
    %v42 = vld [vmem:[#allocation2 + $0x2c] sm:$0xf]
    %v43 = vld [vmem:[#allocation2 + $0x30] sm:$0xf]
    %v44 = vld [vmem:[#allocation2 + $0x34] sm:$0xf]
    %v45 = vld [vmem:[#allocation2 + $0x38] sm:$0xf]
    %v46 = vld [vmem:[#allocation2 + $0x3c] sm:$0xf]
    %v47 = vld [vmem:[#allocation2 + $0x40] sm:$0xf]
    %v48 = vld [vmem:[#allocation2 + $0x44] sm:$0xf]
    %v49 = vld [vmem:[#allocation2 + $0x48] sm:$0xf]
    %v50 = vld [vmem:[#allocation2 + $0x4c] sm:$0xf]
    %v51 = vld [vmem:[#allocation2 + $0x50] sm:$0xf]
    %v52 = vld [vmem:[#allocation2 + $0x54] sm:$0xf]
    %v53 = vld [vmem:[#allocation2 + $0x58] sm:$0xf]
    %v54 = vld [vmem:[#allocation2 + $0x5c] sm:$0xf]
    %v55 = vld [vmem:[#allocation2 + $0x60] sm:$0xf]
    %v56 = vld [vmem:[#allocation2 + $0x64] sm:$0xf]
    %v57 = vld [vmem:[#allocation2 + $0x68] sm:$0xf]
    %v58 = vld [vmem:[#allocation2 + $0x6c] sm:$0xf]
    %v59 = vld [vmem:[#allocation2 + $0x70] sm:$0xf]
    %v60 = vld [vmem:[#allocation2 + $0x74] sm:$0xf]
    %v61 = vld [vmem:[#allocation2 + $0x78] sm:$0xf]
    %v62 = vld [vmem:[#allocation2 + $0x7c] sm:$0xf]
    %v63 = vld [vmem:[%s2] sm:$0x1]
    %v65 = vperm.slane %v63, 0
    %68 = vst [vmem:[#allocation1] ss:$9 sm:$0xff] %v30
    %v69 = vld [vmem:[#allocation1] sm:$0xff]
    %v70 = vld [vmem:[#allocation1 + $0x9] sm:$0xff]
    %v105 = vunpack.c.l.b16 %v31
    %v106 = vunpack.c.l.b16 %v32
    %v107 = vunpack.c.l.b16 %v33
    %v108 = vunpack.c.l.b16 %v34
    %v109 = vunpack.c.l.b16 %v35
    %v110 = vunpack.c.l.b16 %v36
    %v111 = vunpack.c.l.b16 %v37
    %v112 = vunpack.c.l.b16 %v38
    %v113 = vunpack.c.l.b16 %v39
    %v114 = vunpack.c.l.b16 %v40
    %v115 = vunpack.c.l.b16 %v41
    %v116 = vunpack.c.l.b16 %v42
    %v117 = vunpack.c.l.b16 %v43
    %v118 = vunpack.c.l.b16 %v44
    %v119 = vunpack.c.l.b16 %v45
    %v120 = vunpack.c.l.b16 %v46
    %v121 = vunpack.c.l.b16 %v47
    %v122 = vunpack.c.l.b16 %v48
    %v123 = vunpack.c.l.b16 %v49
    %v124 = vunpack.c.l.b16 %v50
    %v125 = vunpack.c.l.b16 %v51
    %v126 = vunpack.c.l.b16 %v52
    %v127 = vunpack.c.l.b16 %v53
    %v128 = vunpack.c.l.b16 %v54
    %v129 = vunpack.c.l.b16 %v55
    %v130 = vunpack.c.l.b16 %v56
    %v131 = vunpack.c.l.b16 %v57
    %v132 = vunpack.c.l.b16 %v58
    %v133 = vunpack.c.l.b16 %v59
    %v134 = vunpack.c.l.b16 %v60
    %v135 = vunpack.c.l.b16 %v61
    %v136 = vunpack.c.l.b16 %v62
    %v137 = vpack.c.b16 %v106, %v105
    %v138 = vpack.c.b16 %v108, %v107
    %v139 = vpack.c.b16 %v110, %v109
    %v140 = vpack.c.b16 %v112, %v111
    %v141 = vpack.c.b16 %v114, %v113
    %v142 = vpack.c.b16 %v116, %v115
    %v143 = vpack.c.b16 %v118, %v117
    %v144 = vpack.c.b16 %v120, %v119
    %v145 = vpack.c.b16 %v122, %v121
    %v146 = vpack.c.b16 %v124, %v123
    %v147 = vpack.c.b16 %v126, %v125
    %v148 = vpack.c.b16 %v128, %v127
    %v149 = vpack.c.b16 %v130, %v129
    %v150 = vpack.c.b16 %v132, %v131
    %v151 = vpack.c.b16 %v134, %v133
    %v152 = vpack.c.b16 %v136, %v135
    %169 = vmatpush.bf16.msra.mxu0 %v144
    %170 = vmatpush.bf16.msra.mxu0 %v143
    %171 = vmatpush.bf16.msra.mxu0 %v142
    %172 = vmatpush.bf16.msra.mxu0 %v141
    %173 = vmatpush.bf16.msra.mxu0 %v140
    %174 = vmatpush.bf16.msra.mxu0 %v139
    %175 = vmatpush.bf16.msra.mxu0 %v138
    %176 = vmatpush.bf16.msra.mxu0 %v137
    %177 = vmatmul.bf16.gmra.mxu0 %v69
    %v178 = vpop.f32.mrf.mxu0
    %v179 = vadd.f32 %v65, %v178
    %v180 = vpop.f32.mrf.mxu0
    %181 = vdwg.mxu0
    %182 = vmatpush.bf16.msra.mxu0 %v152
    %183 = vmatpush.bf16.msra.mxu0 %v151
    %184 = vmatpush.bf16.msra.mxu0 %v150
    %185 = vmatpush.bf16.msra.mxu0 %v149
    %186 = vmatpush.bf16.msra.mxu0 %v148
    %187 = vmatpush.bf16.msra.mxu0 %v147
    %188 = vmatpush.bf16.msra.mxu0 %v146
    %189 = vmatpush.bf16.msra.mxu0 %v145
    %190 = vmatmul.bf16.gmra.mxu0 %v70
    %v191 = vpop.f32.mrf.mxu0
    %v192 = vadd.f32 %v179, %v191
    %v193 = vpop.f32.mrf.mxu0
    %194 = vdwg.mxu0
    %v195 = vsub.f32 0.0, %v192
    %v196 = vmul.f32 %v195, 1.442695
    %v197 = vpow.pop %v196
    %v198 = vadd.f32 %v197, 1.0
    %v199 = vrcp.pop %v198
    %v200 = vmul.f32 %v198, %v199
    %v201 = vsub.f32 1.0, %v200
    %v202 = vmul.f32 %v199, %v201
    %v203 = vadd.f32 %v199, %v202
    %vm204 = vweird.f32 %v198
    %vm205 = vweird.f32 %v199
    %vm206 = vmor %vm204, %vm205
    %v207 = vsel %vm206, %v199, %v203
    %v208 = vand.u32 2147483647, %v198
    %vm209 = vcmp.eq.f32.partialorder %v208, 8.507059e+37
    %v210 = vand.u32 %v198, 2147483648
    %v211 = vor.u32 1.1754944e-38, %v210
    %v212 = vsel %vm209, %v211, %v207
    %v213 = vmul.f32 1.0, %v212
    %214 = vst [vmem:[%s3] sm:$0x3] %v213
    // Predicated region
    $region18: #{net_forward.2} parent=1 // pred_check
      _
    $region19: #{net_forward.2} parent=1 // pred_check_branch
      %216 = sbr.rel (0) target = $region21
    $region20: #{net_forward.2} parent=1 // pred_region
      _
    $region21: #{net_forward.2} parent=1 // pred_fallthru
      _
    // Predicated region
    $region22: #{net_forward.2} parent=1 // pred_check
      _
    $region23: #{net_forward.2} parent=1 // pred_check_branch
      %218 = sbr.rel (0) target = $region25
    $region24: #{net_forward.2} parent=1 // pred_region
      _
    $region25: #{net_forward.2} parent=1 // pred_fallthru
      _
    %219 = vsyncpa [#allocation3], 1

// kernel: net_forward.3
$region0: #{net_forward.3}
  #allocation0 [shape = 'u32[]', space=smem, size = 0x4, offset = 0x4, fixed_abs, tag = 'smem constant byte address 0x4 - core index']
  #allocation1 [shape = 'u32[72,128]{1,0:T(1,128)}', space=vmem, size = 0x9000, scoped, tag = 'internal scratch']
  %s0 = inlined_call_operand.vmem [shape: bf16[8,256], index: 0, kind: input, shape index: {}]
  %s1 = inlined_call_operand.vmem [shape: f32[8,128], index: 1, kind: input, shape index: {}]
  %s2 = inlined_call_operand.hbm [shape: bf16[256,1024], index: 2, kind: input, shape index: {}]
  %s3 = inlined_call_operand.vmem [shape: f32[1,256], index: 3, kind: input, shape index: {}]
  %s4 = inlined_call_operand.hbm [shape: bf16[256,512], index: 4, kind: input, shape index: {}]
  %s5 = inlined_call_operand.vmem [shape: f32[1,128], index: 5, kind: input, shape index: {}]
  %s6 = inlined_call_operand.hbm [shape: bf16[128,128], index: 6, kind: input, shape index: {}]
  %s7 = inlined_call_operand.vmem [shape: f32[1,128], index: 7, kind: input, shape index: {}]
  %s8 = inlined_call_operand.hbm [shape: bf16[128,128], index: 8, kind: input, shape index: {}]
  %s9 = inlined_call_operand.vmem [shape: f32[1,128], index: 9, kind: input, shape index: {}]
  %s10 = inlined_call_operand.vmem [shape: f32[8,128], index: 10, kind: output, shape index: {}]
  %s11 = sld [smem:[#allocation0]]
  $region66: #{net_forward.3} parent=0
    _
  %s13 = ssub.s32 1, %s11
  %s14 = scalar_select 0, %s13, %s11
  $region1: #{net_forward.3} parent=0
    #allocation2 [shape = 'u8[524288]{0}', space=vmem, size = 0x80000, scoped, tag = 'input window, operand 2, single buffered']
    #allocation3 [shape = 's32[1]{0}', space=sflag, size = 0x4, scoped, tag = 'scoped memory for net_forward.3']
    #allocation4 [shape = 'u8[262144]{0}', space=vmem, size = 0x40000, scoped, tag = 'input window, operand 4, single buffered']
    #allocation5 [shape = 's32[1]{0}', space=sflag, size = 0x4, scoped, tag = 'scoped memory for net_forward.3']
    #allocation6 [shape = 'u8[32768]{0}', space=vmem, size = 0x8000, scoped, tag = 'input window, operand 6, single buffered']
    #allocation7 [shape = 'u8[32768]{0}', space=vmem, size = 0x8000, scoped, tag = 'input window, operand 8, single buffered']
    #allocation8 [shape = 's32[1]{0}', space=sflag, size = 0x4, scoped, tag = 'scoped memory for net_forward.3']
    %15 = vsyncpa [#allocation3], 0
    %16 = vsyncpa [#allocation5], 0
    %17 = vsyncpa [#allocation8], 0
    // Predicated region
    $region2: #{net_forward.3} parent=1 // pred_check
      _
    $region3: #{net_forward.3} parent=1 // pred_check_branch
      %19 = sbr.rel (0) target = $region5
    $region4: #{net_forward.3} parent=1 // pred_region
      _
    $region5: #{net_forward.3} parent=1 // pred_fallthru
      _
    // Predicated region
    $region6: #{net_forward.3} parent=1 // pred_check
      _
    $region7: #{net_forward.3} parent=1 // pred_check_branch
      %21 = sbr.rel (0) target = $region9
    $region8: #{net_forward.3} parent=1 // pred_region
      _
    $region9: #{net_forward.3} parent=1 // pred_fallthru
      _
    // Predicated region
    $region10: #{net_forward.3} parent=1 // pred_check
      _
    $region11: #{net_forward.3} parent=1 // pred_check_branch
      %23 = sbr.rel (0) target = $region13
    $region12: #{net_forward.3} parent=1 // pred_region
      %25 = vsyncadd [#allocation3], 0
      %s26 = sshll.u32 %s2, 4
      %s27 = int_to_ptr.hbm [resolvable:$true] %s26
      %s28 = sshll.u32 [#allocation2], 4
      %s29 = int_to_ptr.vmem [resolvable:$true] %s28
      %34 = dma.hbm_to_vmem [thread:$0]  %s27, 16384, %s29, [#allocation3], 512, 512, 32
    $region13: #{net_forward.3} parent=1 // pred_fallthru
      _
    // Predicated region
    $region14: #{net_forward.3} parent=1 // pred_check
      _
    $region15: #{net_forward.3} parent=1 // pred_check_branch
      %36 = sbr.rel (0) target = $region17
    $region16: #{net_forward.3} parent=1 // pred_region
      _
    $region17: #{net_forward.3} parent=1 // pred_fallthru
      _
    // Predicated region
    $region18: #{net_forward.3} parent=1 // pred_check
      _
    $region19: #{net_forward.3} parent=1 // pred_check_branch
      %38 = sbr.rel (0) target = $region21
    $region20: #{net_forward.3} parent=1 // pred_region
      %40 = vsyncadd [#allocation5], 0
      %s41 = sshll.u32 %s4, 4
      %s42 = int_to_ptr.hbm [resolvable:$true] %s41
      %s43 = sshll.u32 [#allocation4], 4
      %s44 = int_to_ptr.vmem [resolvable:$true] %s43
      %49 = dma.hbm_to_vmem [thread:$0]  %s42, 8192, %s44, [#allocation5], 256, 256, 16
    $region21: #{net_forward.3} parent=1 // pred_fallthru
      _
    // Predicated region
    $region22: #{net_forward.3} parent=1 // pred_check
      _
    $region23: #{net_forward.3} parent=1 // pred_check_branch
      %51 = sbr.rel (0) target = $region25
    $region24: #{net_forward.3} parent=1 // pred_region
      _
    $region25: #{net_forward.3} parent=1 // pred_fallthru
      _
    // Predicated region
    $region26: #{net_forward.3} parent=1 // pred_check
      _
    $region27: #{net_forward.3} parent=1 // pred_check_branch
      %53 = sbr.rel (0) target = $region29
    $region28: #{net_forward.3} parent=1 // pred_region
      %55 = vsyncadd [#allocation5], 0
      %s56 = sshll.u32 %s6, 4
      %s57 = int_to_ptr.hbm [resolvable:$true] %s56
      %s58 = sshll.u32 [#allocation6], 4
      %s59 = int_to_ptr.vmem [resolvable:$true] %s58
      %64 = dma.hbm_to_vmem [thread:$0]  %s57, 1024, %s59, [#allocation5], 64, 64, 4
    $region29: #{net_forward.3} parent=1 // pred_fallthru
      _
    // Predicated region
    $region30: #{net_forward.3} parent=1 // pred_check
      _
    $region31: #{net_forward.3} parent=1 // pred_check_branch
      %66 = sbr.rel (0) target = $region33
    $region32: #{net_forward.3} parent=1 // pred_region
      _
    $region33: #{net_forward.3} parent=1 // pred_fallthru
      _
    // Predicated region
    $region34: #{net_forward.3} parent=1 // pred_check
      _
    $region35: #{net_forward.3} parent=1 // pred_check_branch
      %68 = sbr.rel (0) target = $region37
    $region36: #{net_forward.3} parent=1 // pred_region
      %70 = vsyncadd [#allocation8], 0
      %s71 = sshll.u32 %s8, 4
      %s72 = int_to_ptr.hbm [resolvable:$true] %s71
      %s73 = sshll.u32 [#allocation7], 4
      %s74 = int_to_ptr.vmem [resolvable:$true] %s73
      %79 = dma.hbm_to_vmem [thread:$0]  %s72, 1024, %s74, [#allocation8], 64, 64, 4
    $region37: #{net_forward.3} parent=1 // pred_fallthru
      _
    // Predicated region
    $region38: #{net_forward.3} parent=1 // pred_check
      _
    $region39: #{net_forward.3} parent=1 // pred_check_branch
      %81 = sbr.rel (0) target = $region41
    $region40: #{net_forward.3} parent=1 // pred_region
      _
    $region41: #{net_forward.3} parent=1 // pred_fallthru
      _
    // Predicated region
    $region42: #{net_forward.3} parent=1 // pred_check
      _
    $region43: #{net_forward.3} parent=1 // pred_check_branch
      %83 = sbr.rel (0) target = $region45
    $region44: #{net_forward.3} parent=1 // pred_region
      %85 = dma.done [#allocation3], 16384
    $region45: #{net_forward.3} parent=1 // pred_fallthru
      _
    // Predicated region
    $region46: #{net_forward.3} parent=1 // pred_check
      _
    $region47: #{net_forward.3} parent=1 // pred_check_branch
      %87 = sbr.rel (0) target = $region49
    $region48: #{net_forward.3} parent=1 // pred_region
      %89 = dma.done [#allocation5], 8192
    $region49: #{net_forward.3} parent=1 // pred_fallthru
      _
    // Predicated region
    $region50: #{net_forward.3} parent=1 // pred_check
      _
    $region51: #{net_forward.3} parent=1 // pred_check_branch
      %91 = sbr.rel (0) target = $region53
    $region52: #{net_forward.3} parent=1 // pred_region
      %93 = dma.done [#allocation5], 1024
    $region53: #{net_forward.3} parent=1 // pred_fallthru
      _
    // Predicated region
    $region54: #{net_forward.3} parent=1 // pred_check
      _
    $region55: #{net_forward.3} parent=1 // pred_check_branch
      %95 = sbr.rel (0) target = $region57
    $region56: #{net_forward.3} parent=1 // pred_region
      %97 = dma.done [#allocation8], 1024
    $region57: #{net_forward.3} parent=1 // pred_fallthru
      _
    %v98 = vld [vmem:[%s0] sm:$0xff]
    %v99 = vld [vmem:[#allocation2] sm:$0xff]
    %v100 = vld [vmem:[#allocation2 + $0x8] sm:$0xff]
    %v101 = vld [vmem:[#allocation2 + $0x10] sm:$0xff]
    %v102 = vld [vmem:[#allocation2 + $0x18] sm:$0xff]
    %v103 = vld [vmem:[#allocation2 + $0x20] sm:$0xff]
    %v104 = vld [vmem:[#allocation2 + $0x28] sm:$0xff]
    %v105 = vld [vmem:[#allocation2 + $0x30] sm:$0xff]
    %v106 = vld [vmem:[#allocation2 + $0x38] sm:$0xff]
    %v107 = vld [vmem:[#allocation2 + $0x40] sm:$0xff]
    %v108 = vld [vmem:[#allocation2 + $0x48] sm:$0xff]
    %v109 = vld [vmem:[#allocation2 + $0x50] sm:$0xff]
    %v110 = vld [vmem:[#allocation2 + $0x58] sm:$0xff]
    %v111 = vld [vmem:[#allocation2 + $0x60] sm:$0xff]
    %v112 = vld [vmem:[#allocation2 + $0x68] sm:$0xff]
    %v113 = vld [vmem:[#allocation2 + $0x70] sm:$0xff]
    %v114 = vld [vmem:[#allocation2 + $0x78] sm:$0xff]
    %v115 = vld [vmem:[#allocation2 + $0x80] sm:$0xff]
    %v116 = vld [vmem:[#allocation2 + $0x88] sm:$0xff]
    %v117 = vld [vmem:[#allocation2 + $0x90] sm:$0xff]
    %v118 = vld [vmem:[#allocation2 + $0x98] sm:$0xff]
    %v119 = vld [vmem:[#allocation2 + $0xa0] sm:$0xff]
    %v120 = vld [vmem:[#allocation2 + $0xa8] sm:$0xff]
    %v121 = vld [vmem:[#allocation2 + $0xb0] sm:$0xff]
    %v122 = vld [vmem:[#allocation2 + $0xb8] sm:$0xff]
    %v123 = vld [vmem:[#allocation2 + $0xc0] sm:$0xff]
    %v124 = vld [vmem:[#allocation2 + $0xc8] sm:$0xff]
    %v125 = vld [vmem:[#allocation2 + $0xd0] sm:$0xff]
    %v126 = vld [vmem:[#allocation2 + $0xd8] sm:$0xff]
    %v127 = vld [vmem:[#allocation2 + $0xe0] sm:$0xff]
    %v128 = vld [vmem:[#allocation2 + $0xe8] sm:$0xff]
    %v129 = vld [vmem:[#allocation2 + $0xf0] sm:$0xff]
    %v130 = vld [vmem:[#allocation2 + $0xf8] sm:$0xff]
    %v131 = vld [vmem:[#allocation2 + $0x100] sm:$0xff]
    %v132 = vld [vmem:[#allocation2 + $0x108] sm:$0xff]
    %v133 = vld [vmem:[#allocation2 + $0x110] sm:$0xff]
    %v134 = vld [vmem:[#allocation2 + $0x118] sm:$0xff]
    %v135 = vld [vmem:[#allocation2 + $0x120] sm:$0xff]
    %v136 = vld [vmem:[#allocation2 + $0x128] sm:$0xff]
    %v137 = vld [vmem:[#allocation2 + $0x130] sm:$0xff]
    %v138 = vld [vmem:[#allocation2 + $0x138] sm:$0xff]
    %v139 = vld [vmem:[#allocation2 + $0x140] sm:$0xff]
    %v140 = vld [vmem:[#allocation2 + $0x148] sm:$0xff]
    %v141 = vld [vmem:[#allocation2 + $0x150] sm:$0xff]
    %v142 = vld [vmem:[#allocation2 + $0x158] sm:$0xff]
    %v143 = vld [vmem:[#allocation2 + $0x160] sm:$0xff]
    %v144 = vld [vmem:[#allocation2 + $0x168] sm:$0xff]
    %v145 = vld [vmem:[#allocation2 + $0x170] sm:$0xff]
    %v146 = vld [vmem:[#allocation2 + $0x178] sm:$0xff]
    %v147 = vld [vmem:[#allocation2 + $0x180] sm:$0xff]
    %v148 = vld [vmem:[#allocation2 + $0x188] sm:$0xff]
    %v149 = vld [vmem:[#allocation2 + $0x190] sm:$0xff]
    %v150 = vld [vmem:[#allocation2 + $0x198] sm:$0xff]
    %v151 = vld [vmem:[#allocation2 + $0x1a0] sm:$0xff]
    %v152 = vld [vmem:[#allocation2 + $0x1a8] sm:$0xff]
    %v153 = vld [vmem:[#allocation2 + $0x1b0] sm:$0xff]
    %v154 = vld [vmem:[#allocation2 + $0x1b8] sm:$0xff]
    %v155 = vld [vmem:[#allocation2 + $0x1c0] sm:$0xff]
    %v156 = vld [vmem:[#allocation2 + $0x1c8] sm:$0xff]
    %v157 = vld [vmem:[#allocation2 + $0x1d0] sm:$0xff]
    %v158 = vld [vmem:[#allocation2 + $0x1d8] sm:$0xff]
    %v159 = vld [vmem:[#allocation2 + $0x1e0] sm:$0xff]
    %v160 = vld [vmem:[#allocation2 + $0x1e8] sm:$0xff]
    %v161 = vld [vmem:[#allocation2 + $0x1f0] sm:$0xff]
    %v162 = vld [vmem:[#allocation2 + $0x1f8] sm:$0xff]
    %v163 = vld [vmem:[#allocation2 + $0x200] sm:$0xff]
    %v164 = vld [vmem:[#allocation2 + $0x208] sm:$0xff]
    %v165 = vld [vmem:[#allocation2 + $0x210] sm:$0xff]
    %v166 = vld [vmem:[#allocation2 + $0x218] sm:$0xff]
    %v167 = vld [vmem:[#allocation2 + $0x220] sm:$0xff]
    %v168 = vld [vmem:[#allocation2 + $0x228] sm:$0xff]
    %v169 = vld [vmem:[#allocation2 + $0x230] sm:$0xff]
    %v170 = vld [vmem:[#allocation2 + $0x238] sm:$0xff]
    %v171 = vld [vmem:[#allocation2 + $0x240] sm:$0xff]
    %v172 = vld [vmem:[#allocation2 + $0x248] sm:$0xff]
    %v173 = vld [vmem:[#allocation2 + $0x250] sm:$0xff]
    %v174 = vld [vmem:[#allocation2 + $0x258] sm:$0xff]
    %v175 = vld [vmem:[#allocation2 + $0x260] sm:$0xff]
    %v176 = vld [vmem:[#allocation2 + $0x268] sm:$0xff]
    %v177 = vld [vmem:[#allocation2 + $0x270] sm:$0xff]
    %v178 = vld [vmem:[#allocation2 + $0x278] sm:$0xff]
    %v179 = vld [vmem:[#allocation2 + $0x280] sm:$0xff]
    %v180 = vld [vmem:[#allocation2 + $0x288] sm:$0xff]
    %v181 = vld [vmem:[#allocation2 + $0x290] sm:$0xff]
    %v182 = vld [vmem:[#allocation2 + $0x298] sm:$0xff]
    %v183 = vld [vmem:[#allocation2 + $0x2a0] sm:$0xff]
    %v184 = vld [vmem:[#allocation2 + $0x2a8] sm:$0xff]
    %v185 = vld [vmem:[#allocation2 + $0x2b0] sm:$0xff]
    %v186 = vld [vmem:[#allocation2 + $0x2b8] sm:$0xff]
    %v187 = vld [vmem:[#allocation2 + $0x2c0] sm:$0xff]
    %v188 = vld [vmem:[#allocation2 + $0x2c8] sm:$0xff]
    %v189 = vld [vmem:[#allocation2 + $0x2d0] sm:$0xff]
    %v190 = vld [vmem:[#allocation2 + $0x2d8] sm:$0xff]
    %v191 = vld [vmem:[#allocation2 + $0x2e0] sm:$0xff]
    %v192 = vld [vmem:[#allocation2 + $0x2e8] sm:$0xff]
    %v193 = vld [vmem:[#allocation2 + $0x2f0] sm:$0xff]
    %v194 = vld [vmem:[#allocation2 + $0x2f8] sm:$0xff]
    %v195 = vld [vmem:[#allocation2 + $0x300] sm:$0xff]
    %v196 = vld [vmem:[#allocation2 + $0x308] sm:$0xff]
    %v197 = vld [vmem:[#allocation2 + $0x310] sm:$0xff]
    %v198 = vld [vmem:[#allocation2 + $0x318] sm:$0xff]
    %v199 = vld [vmem:[#allocation2 + $0x320] sm:$0xff]
    %v200 = vld [vmem:[#allocation2 + $0x328] sm:$0xff]
    %v201 = vld [vmem:[#allocation2 + $0x330] sm:$0xff]
    %v202 = vld [vmem:[#allocation2 + $0x338] sm:$0xff]
    %v203 = vld [vmem:[#allocation2 + $0x340] sm:$0xff]
    %v204 = vld [vmem:[#allocation2 + $0x348] sm:$0xff]
    %v205 = vld [vmem:[#allocation2 + $0x350] sm:$0xff]
    %v206 = vld [vmem:[#allocation2 + $0x358] sm:$0xff]
    %v207 = vld [vmem:[#allocation2 + $0x360] sm:$0xff]
    %v208 = vld [vmem:[#allocation2 + $0x368] sm:$0xff]
    %v209 = vld [vmem:[#allocation2 + $0x370] sm:$0xff]
    %v210 = vld [vmem:[#allocation2 + $0x378] sm:$0xff]
    %v211 = vld [vmem:[#allocation2 + $0x380] sm:$0xff]
    %v212 = vld [vmem:[#allocation2 + $0x388] sm:$0xff]
    %v213 = vld [vmem:[#allocation2 + $0x390] sm:$0xff]
    %v214 = vld [vmem:[#allocation2 + $0x398] sm:$0xff]
    %v215 = vld [vmem:[#allocation2 + $0x3a0] sm:$0xff]
    %v216 = vld [vmem:[#allocation2 + $0x3a8] sm:$0xff]
    %v217 = vld [vmem:[#allocation2 + $0x3b0] sm:$0xff]
    %v218 = vld [vmem:[#allocation2 + $0x3b8] sm:$0xff]
    %v219 = vld [vmem:[#allocation2 + $0x3c0] sm:$0xff]
    %v220 = vld [vmem:[#allocation2 + $0x3c8] sm:$0xff]
    %v221 = vld [vmem:[#allocation2 + $0x3d0] sm:$0xff]
    %v222 = vld [vmem:[#allocation2 + $0x3d8] sm:$0xff]
    %v223 = vld [vmem:[#allocation2 + $0x3e0] sm:$0xff]
    %v224 = vld [vmem:[#allocation2 + $0x3e8] sm:$0xff]
    %v225 = vld [vmem:[#allocation2 + $0x3f0] sm:$0xff]
    %v226 = vld [vmem:[#allocation2 + $0x3f8] sm:$0xff]
    %v228 = vunpack.c.l.b16 %v98
    %v229 = vunpack.c.h.b16 %v98
    %v230 = vpack.c.b16 %v228, %v228
    %v231 = vpack.c.b16 %v229, %v229
    %v362 = vunpack.c.l.b16 %v99
    %v363 = vunpack.c.h.b16 %v99
    %v364 = vunpack.c.l.b16 %v100
    %v365 = vunpack.c.h.b16 %v100
    %v366 = vunpack.c.l.b16 %v101
    %v367 = vunpack.c.h.b16 %v101
    %v368 = vunpack.c.l.b16 %v102
    %v369 = vunpack.c.h.b16 %v102
    %v370 = vunpack.c.l.b16 %v103
    %v371 = vunpack.c.h.b16 %v103
    %v372 = vunpack.c.l.b16 %v104
    %v373 = vunpack.c.h.b16 %v104
    %v374 = vunpack.c.l.b16 %v105
    %v375 = vunpack.c.h.b16 %v105
    %v376 = vunpack.c.l.b16 %v106
    %v377 = vunpack.c.h.b16 %v106
    %v378 = vunpack.c.l.b16 %v107
    %v379 = vunpack.c.h.b16 %v107
    %v380 = vunpack.c.l.b16 %v108
    %v381 = vunpack.c.h.b16 %v108
    %v382 = vunpack.c.l.b16 %v109
    %v383 = vunpack.c.h.b16 %v109
    %v384 = vunpack.c.l.b16 %v110
    %v385 = vunpack.c.h.b16 %v110
    %v386 = vunpack.c.l.b16 %v111
    %v387 = vunpack.c.h.b16 %v111
    %v388 = vunpack.c.l.b16 %v112
    %v389 = vunpack.c.h.b16 %v112
    %v390 = vunpack.c.l.b16 %v113
    %v391 = vunpack.c.h.b16 %v113
    %v392 = vunpack.c.l.b16 %v114
    %v393 = vunpack.c.h.b16 %v114
    %v394 = vunpack.c.l.b16 %v115
    %v395 = vunpack.c.h.b16 %v115
    %v396 = vunpack.c.l.b16 %v116
    %v397 = vunpack.c.h.b16 %v116
    %v398 = vunpack.c.l.b16 %v117
    %v399 = vunpack.c.h.b16 %v117
    %v400 = vunpack.c.l.b16 %v118
    %v401 = vunpack.c.h.b16 %v118
    %v402 = vunpack.c.l.b16 %v119
    %v403 = vunpack.c.h.b16 %v119
    %v404 = vunpack.c.l.b16 %v120
    %v405 = vunpack.c.h.b16 %v120
    %v406 = vunpack.c.l.b16 %v121
    %v407 = vunpack.c.h.b16 %v121
    %v408 = vunpack.c.l.b16 %v122
    %v409 = vunpack.c.h.b16 %v122
    %v410 = vunpack.c.l.b16 %v123
    %v411 = vunpack.c.h.b16 %v123
    %v412 = vunpack.c.l.b16 %v124
    %v413 = vunpack.c.h.b16 %v124
    %v414 = vunpack.c.l.b16 %v125
    %v415 = vunpack.c.h.b16 %v125
    %v416 = vunpack.c.l.b16 %v126
    %v417 = vunpack.c.h.b16 %v126
    %v418 = vunpack.c.l.b16 %v127
    %v419 = vunpack.c.h.b16 %v127
    %v420 = vunpack.c.l.b16 %v128
    %v421 = vunpack.c.h.b16 %v128
    %v422 = vunpack.c.l.b16 %v129
    %v423 = vunpack.c.h.b16 %v129
    %v424 = vunpack.c.l.b16 %v130
    %v425 = vunpack.c.h.b16 %v130
    %v426 = vunpack.c.l.b16 %v131
    %v427 = vunpack.c.h.b16 %v131
    %v428 = vunpack.c.l.b16 %v132
    %v429 = vunpack.c.h.b16 %v132
    %v430 = vunpack.c.l.b16 %v133
    %v431 = vunpack.c.h.b16 %v133
    %v432 = vunpack.c.l.b16 %v134
    %v433 = vunpack.c.h.b16 %v134
    %v434 = vunpack.c.l.b16 %v135
    %v435 = vunpack.c.h.b16 %v135
    %v436 = vunpack.c.l.b16 %v136
    %v437 = vunpack.c.h.b16 %v136
    %v438 = vunpack.c.l.b16 %v137
    %v439 = vunpack.c.h.b16 %v137
    %v440 = vunpack.c.l.b16 %v138
    %v441 = vunpack.c.h.b16 %v138
    %v442 = vunpack.c.l.b16 %v139
    %v443 = vunpack.c.h.b16 %v139
    %v444 = vunpack.c.l.b16 %v140
    %v445 = vunpack.c.h.b16 %v140
    %v446 = vunpack.c.l.b16 %v141
    %v447 = vunpack.c.h.b16 %v141
    %v448 = vunpack.c.l.b16 %v142
    %v449 = vunpack.c.h.b16 %v142
    %v450 = vunpack.c.l.b16 %v143
    %v451 = vunpack.c.h.b16 %v143
    %v452 = vunpack.c.l.b16 %v144
    %v453 = vunpack.c.h.b16 %v144
    %v454 = vunpack.c.l.b16 %v145
    %v455 = vunpack.c.h.b16 %v145
    %v456 = vunpack.c.l.b16 %v146
    %v457 = vunpack.c.h.b16 %v146
    %v458 = vunpack.c.l.b16 %v147
    %v459 = vunpack.c.h.b16 %v147
    %v460 = vunpack.c.l.b16 %v148
    %v461 = vunpack.c.h.b16 %v148
    %v462 = vunpack.c.l.b16 %v149
    %v463 = vunpack.c.h.b16 %v149
    %v464 = vunpack.c.l.b16 %v150
    %v465 = vunpack.c.h.b16 %v150
    %v466 = vunpack.c.l.b16 %v151
    %v467 = vunpack.c.h.b16 %v151
    %v468 = vunpack.c.l.b16 %v152
    %v469 = vunpack.c.h.b16 %v152
    %v470 = vunpack.c.l.b16 %v153
    %v471 = vunpack.c.h.b16 %v153
    %v472 = vunpack.c.l.b16 %v154
    %v473 = vunpack.c.h.b16 %v154
    %v474 = vunpack.c.l.b16 %v155
    %v475 = vunpack.c.h.b16 %v155
    %v476 = vunpack.c.l.b16 %v156
    %v477 = vunpack.c.h.b16 %v156
    %v478 = vunpack.c.l.b16 %v157
    %v479 = vunpack.c.h.b16 %v157
    %v480 = vunpack.c.l.b16 %v158
    %v481 = vunpack.c.h.b16 %v158
    %v482 = vunpack.c.l.b16 %v159
    %v483 = vunpack.c.h.b16 %v159
    %v484 = vunpack.c.l.b16 %v160
    %v485 = vunpack.c.h.b16 %v160
    %v486 = vunpack.c.l.b16 %v161
    %v487 = vunpack.c.h.b16 %v161
    %v488 = vunpack.c.l.b16 %v162
    %v489 = vunpack.c.h.b16 %v162
    %v490 = vunpack.c.l.b16 %v163
    %v491 = vunpack.c.h.b16 %v163
    %v492 = vunpack.c.l.b16 %v164
    %v493 = vunpack.c.h.b16 %v164
    %v494 = vunpack.c.l.b16 %v165
    %v495 = vunpack.c.h.b16 %v165
    %v496 = vunpack.c.l.b16 %v166
    %v497 = vunpack.c.h.b16 %v166
    %v498 = vunpack.c.l.b16 %v167
    %v499 = vunpack.c.h.b16 %v167
    %v500 = vunpack.c.l.b16 %v168
    %v501 = vunpack.c.h.b16 %v168
    %v502 = vunpack.c.l.b16 %v169
    %v503 = vunpack.c.h.b16 %v169
    %v504 = vunpack.c.l.b16 %v170
    %v505 = vunpack.c.h.b16 %v170
    %v506 = vunpack.c.l.b16 %v171
    %v507 = vunpack.c.h.b16 %v171
    %v508 = vunpack.c.l.b16 %v172
    %v509 = vunpack.c.h.b16 %v172
    %v510 = vunpack.c.l.b16 %v173
    %v511 = vunpack.c.h.b16 %v173
    %v512 = vunpack.c.l.b16 %v174
    %v513 = vunpack.c.h.b16 %v174
    %v514 = vunpack.c.l.b16 %v175
    %v515 = vunpack.c.h.b16 %v175
    %v516 = vunpack.c.l.b16 %v176
    %v517 = vunpack.c.h.b16 %v176
    %v518 = vunpack.c.l.b16 %v177
    %v519 = vunpack.c.h.b16 %v177
    %v520 = vunpack.c.l.b16 %v178
    %v521 = vunpack.c.h.b16 %v178
    %v522 = vunpack.c.l.b16 %v179
    %v523 = vunpack.c.h.b16 %v179
    %v524 = vunpack.c.l.b16 %v180
    %v525 = vunpack.c.h.b16 %v180
    %v526 = vunpack.c.l.b16 %v181
    %v527 = vunpack.c.h.b16 %v181
    %v528 = vunpack.c.l.b16 %v182
    %v529 = vunpack.c.h.b16 %v182
    %v530 = vunpack.c.l.b16 %v183
    %v531 = vunpack.c.h.b16 %v183
    %v532 = vunpack.c.l.b16 %v184
    %v533 = vunpack.c.h.b16 %v184
    %v534 = vunpack.c.l.b16 %v185
    %v535 = vunpack.c.h.b16 %v185
    %v536 = vunpack.c.l.b16 %v186
    %v537 = vunpack.c.h.b16 %v186
    %v538 = vunpack.c.l.b16 %v187
    %v539 = vunpack.c.h.b16 %v187
    %v540 = vunpack.c.l.b16 %v188
    %v541 = vunpack.c.h.b16 %v188
    %v542 = vunpack.c.l.b16 %v189
    %v543 = vunpack.c.h.b16 %v189
    %v544 = vunpack.c.l.b16 %v190
    %v545 = vunpack.c.h.b16 %v190
    %v546 = vunpack.c.l.b16 %v191
    %v547 = vunpack.c.h.b16 %v191
    %v548 = vunpack.c.l.b16 %v192
    %v549 = vunpack.c.h.b16 %v192
    %v550 = vunpack.c.l.b16 %v193
    %v551 = vunpack.c.h.b16 %v193
    %v552 = vunpack.c.l.b16 %v194
    %v553 = vunpack.c.h.b16 %v194
    %v554 = vunpack.c.l.b16 %v195
    %v555 = vunpack.c.h.b16 %v195
    %v556 = vunpack.c.l.b16 %v196
    %v557 = vunpack.c.h.b16 %v196
    %v558 = vunpack.c.l.b16 %v197
    %v559 = vunpack.c.h.b16 %v197
    %v560 = vunpack.c.l.b16 %v198
    %v561 = vunpack.c.h.b16 %v198
    %v562 = vunpack.c.l.b16 %v199
    %v563 = vunpack.c.h.b16 %v199
    %v564 = vunpack.c.l.b16 %v200
    %v565 = vunpack.c.h.b16 %v200
    %v566 = vunpack.c.l.b16 %v201
    %v567 = vunpack.c.h.b16 %v201
    %v568 = vunpack.c.l.b16 %v202
    %v569 = vunpack.c.h.b16 %v202
    %v570 = vunpack.c.l.b16 %v203
    %v571 = vunpack.c.h.b16 %v203
    %v572 = vunpack.c.l.b16 %v204
    %v573 = vunpack.c.h.b16 %v204
    %v574 = vunpack.c.l.b16 %v205
    %v575 = vunpack.c.h.b16 %v205
    %v576 = vunpack.c.l.b16 %v206
    %v577 = vunpack.c.h.b16 %v206
    %v578 = vunpack.c.l.b16 %v207
    %v579 = vunpack.c.h.b16 %v207
    %v580 = vunpack.c.l.b16 %v208
    %v581 = vunpack.c.h.b16 %v208
    %v582 = vunpack.c.l.b16 %v209
    %v583 = vunpack.c.h.b16 %v209
    %v584 = vunpack.c.l.b16 %v210
    %v585 = vunpack.c.h.b16 %v210
    %v586 = vunpack.c.l.b16 %v211
    %v587 = vunpack.c.h.b16 %v211
    %v588 = vunpack.c.l.b16 %v212
    %v589 = vunpack.c.h.b16 %v212
    %v590 = vunpack.c.l.b16 %v213
    %v591 = vunpack.c.h.b16 %v213
    %v592 = vunpack.c.l.b16 %v214
    %v593 = vunpack.c.h.b16 %v214
    %v594 = vunpack.c.l.b16 %v215
    %v595 = vunpack.c.h.b16 %v215
    %v596 = vunpack.c.l.b16 %v216
    %v597 = vunpack.c.h.b16 %v216
    %v598 = vunpack.c.l.b16 %v217
    %v599 = vunpack.c.h.b16 %v217
    %v600 = vunpack.c.l.b16 %v218
    %v601 = vunpack.c.h.b16 %v218
    %v602 = vunpack.c.l.b16 %v219
    %v603 = vunpack.c.h.b16 %v219
    %v604 = vunpack.c.l.b16 %v220
    %v605 = vunpack.c.h.b16 %v220
    %v606 = vunpack.c.l.b16 %v221
    %v607 = vunpack.c.h.b16 %v221
    %v608 = vunpack.c.l.b16 %v222
    %v609 = vunpack.c.h.b16 %v222
    %v610 = vunpack.c.l.b16 %v223
    %v611 = vunpack.c.h.b16 %v223
    %v612 = vunpack.c.l.b16 %v224
    %v613 = vunpack.c.h.b16 %v224
    %v614 = vunpack.c.l.b16 %v225
    %v615 = vunpack.c.h.b16 %v225
    %v616 = vunpack.c.l.b16 %v226
    %v617 = vunpack.c.h.b16 %v226
    %v618 = vpack.c.b16 %v370, %v362
    %v619 = vpack.c.b16 %v371, %v363
    %v620 = vpack.c.b16 %v372, %v364
    %v621 = vpack.c.b16 %v373, %v365
    %v622 = vpack.c.b16 %v374, %v366
    %v623 = vpack.c.b16 %v375, %v367
    %v624 = vpack.c.b16 %v376, %v368
    %v625 = vpack.c.b16 %v377, %v369
    %v626 = vpack.c.b16 %v386, %v378
    %v627 = vpack.c.b16 %v387, %v379
    %v628 = vpack.c.b16 %v388, %v380
    %v629 = vpack.c.b16 %v389, %v381
    %v630 = vpack.c.b16 %v390, %v382
    %v631 = vpack.c.b16 %v391, %v383
    %v632 = vpack.c.b16 %v392, %v384
    %v633 = vpack.c.b16 %v393, %v385
    %v634 = vpack.c.b16 %v402, %v394
    %v635 = vpack.c.b16 %v403, %v395
    %v636 = vpack.c.b16 %v404, %v396
    %v637 = vpack.c.b16 %v405, %v397
    %v638 = vpack.c.b16 %v406, %v398
    %v639 = vpack.c.b16 %v407, %v399
    %v640 = vpack.c.b16 %v408, %v400
    %v641 = vpack.c.b16 %v409, %v401
    %v642 = vpack.c.b16 %v418, %v410
    %v643 = vpack.c.b16 %v419, %v411
    %v644 = vpack.c.b16 %v420, %v412
    %v645 = vpack.c.b16 %v421, %v413
    %v646 = vpack.c.b16 %v422, %v414
    %v647 = vpack.c.b16 %v423, %v415
    %v648 = vpack.c.b16 %v424, %v416
    %v649 = vpack.c.b16 %v425, %v417
    %v650 = vpack.c.b16 %v434, %v426
    %v651 = vpack.c.b16 %v435, %v427
    %v652 = vpack.c.b16 %v436, %v428
    %v653 = vpack.c.b16 %v437, %v429
    %v654 = vpack.c.b16 %v438, %v430
    %v655 = vpack.c.b16 %v439, %v431
    %v656 = vpack.c.b16 %v440, %v432
    %v657 = vpack.c.b16 %v441, %v433
    %v658 = vpack.c.b16 %v450, %v442
    %v659 = vpack.c.b16 %v451, %v443
    %v660 = vpack.c.b16 %v452, %v444
    %v661 = vpack.c.b16 %v453, %v445
    %v662 = vpack.c.b16 %v454, %v446
    %v663 = vpack.c.b16 %v455, %v447
    %v664 = vpack.c.b16 %v456, %v448
    %v665 = vpack.c.b16 %v457, %v449
    %v666 = vpack.c.b16 %v466, %v458
    %v667 = vpack.c.b16 %v467, %v459
    %v668 = vpack.c.b16 %v468, %v460
    %v669 = vpack.c.b16 %v469, %v461
    %v670 = vpack.c.b16 %v470, %v462
    %v671 = vpack.c.b16 %v471, %v463
    %v672 = vpack.c.b16 %v472, %v464
    %v673 = vpack.c.b16 %v473, %v465
    %v674 = vpack.c.b16 %v482, %v474
    %v675 = vpack.c.b16 %v483, %v475
    %v676 = vpack.c.b16 %v484, %v476
    %v677 = vpack.c.b16 %v485, %v477
    %v678 = vpack.c.b16 %v486, %v478
    %v679 = vpack.c.b16 %v487, %v479
    %v680 = vpack.c.b16 %v488, %v480
    %v681 = vpack.c.b16 %v489, %v481
    %v682 = vpack.c.b16 %v498, %v490
    %v683 = vpack.c.b16 %v499, %v491
    %v684 = vpack.c.b16 %v500, %v492
    %v685 = vpack.c.b16 %v501, %v493
    %v686 = vpack.c.b16 %v502, %v494
    %v687 = vpack.c.b16 %v503, %v495
    %v688 = vpack.c.b16 %v504, %v496
    %v689 = vpack.c.b16 %v505, %v497
    %v690 = vpack.c.b16 %v514, %v506
    %v691 = vpack.c.b16 %v515, %v507
    %v692 = vpack.c.b16 %v516, %v508
    %v693 = vpack.c.b16 %v517, %v509
    %v694 = vpack.c.b16 %v518, %v510
    %v695 = vpack.c.b16 %v519, %v511
    %v696 = vpack.c.b16 %v520, %v512
    %v697 = vpack.c.b16 %v521, %v513
    %v698 = vpack.c.b16 %v530, %v522
    %v699 = vpack.c.b16 %v531, %v523
    %v700 = vpack.c.b16 %v532, %v524
    %v701 = vpack.c.b16 %v533, %v525
    %v702 = vpack.c.b16 %v534, %v526
    %v703 = vpack.c.b16 %v535, %v527
    %v704 = vpack.c.b16 %v536, %v528
    %v705 = vpack.c.b16 %v537, %v529
    %v706 = vpack.c.b16 %v546, %v538
    %v707 = vpack.c.b16 %v547, %v539
    %v708 = vpack.c.b16 %v548, %v540
    %v709 = vpack.c.b16 %v549, %v541
    %v710 = vpack.c.b16 %v550, %v542
    %v711 = vpack.c.b16 %v551, %v543
    %v712 = vpack.c.b16 %v552, %v544
    %v713 = vpack.c.b16 %v553, %v545
    %v714 = vpack.c.b16 %v562, %v554
    %v715 = vpack.c.b16 %v563, %v555
    %v716 = vpack.c.b16 %v564, %v556
    %v717 = vpack.c.b16 %v565, %v557
    %v718 = vpack.c.b16 %v566, %v558
    %v719 = vpack.c.b16 %v567, %v559
    %v720 = vpack.c.b16 %v568, %v560
    %v721 = vpack.c.b16 %v569, %v561
    %v722 = vpack.c.b16 %v578, %v570
    %v723 = vpack.c.b16 %v579, %v571
    %v724 = vpack.c.b16 %v580, %v572
    %v725 = vpack.c.b16 %v581, %v573
    %v726 = vpack.c.b16 %v582, %v574
    %v727 = vpack.c.b16 %v583, %v575
    %v728 = vpack.c.b16 %v584, %v576
    %v729 = vpack.c.b16 %v585, %v577
    %v730 = vpack.c.b16 %v594, %v586
    %v731 = vpack.c.b16 %v595, %v587
    %v732 = vpack.c.b16 %v596, %v588
    %v733 = vpack.c.b16 %v597, %v589
    %v734 = vpack.c.b16 %v598, %v590
    %v735 = vpack.c.b16 %v599, %v591
    %v736 = vpack.c.b16 %v600, %v592
    %v737 = vpack.c.b16 %v601, %v593
    %v738 = vpack.c.b16 %v610, %v602
    %v739 = vpack.c.b16 %v611, %v603
    %v740 = vpack.c.b16 %v612, %v604
    %v741 = vpack.c.b16 %v613, %v605
    %v742 = vpack.c.b16 %v614, %v606
    %v743 = vpack.c.b16 %v615, %v607
    %v744 = vpack.c.b16 %v616, %v608
    %v745 = vpack.c.b16 %v617, %v609
    %874 = vmatpush.bf16.msra.mxu0 %v674
    %875 = vmatpush.bf16.msra.mxu0 %v666
    %876 = vmatpush.bf16.msra.mxu0 %v658
    %877 = vmatpush.bf16.msra.mxu0 %v650
    %878 = vmatpush.bf16.msra.mxu0 %v642
    %879 = vmatpush.bf16.msra.mxu0 %v634
    %880 = vmatpush.bf16.msra.mxu0 %v626
    %881 = vmatpush.bf16.msra.mxu0 %v618
    %882 = vmatmul.bf16.gmra.mxu0 %v230
    %v883 = vpop.f32.mrf.mxu0
    %v884 = vadd.f32 0.0, %v883
    %v885 = vpop.f32.mrf.mxu0
    %886 = vdwg.mxu0
    %887 = vmatpush.bf16.msra.mxu0 %v738
    %888 = vmatpush.bf16.msra.mxu0 %v730
    %889 = vmatpush.bf16.msra.mxu0 %v722
    %890 = vmatpush.bf16.msra.mxu0 %v714
    %891 = vmatpush.bf16.msra.mxu0 %v706
    %892 = vmatpush.bf16.msra.mxu0 %v698
    %893 = vmatpush.bf16.msra.mxu0 %v690
    %894 = vmatpush.bf16.msra.mxu0 %v682
    %895 = vmatmul.bf16.gmra.mxu0 %v231
    %v896 = vpop.f32.mrf.mxu0
    %v897 = vadd.f32 %v884, %v896
    %v898 = vpop.f32.mrf.mxu0
    %899 = vdwg.mxu0
    %900 = vmatpush.bf16.msra.mxu0 %v675
    %901 = vmatpush.bf16.msra.mxu0 %v667
    %902 = vmatpush.bf16.msra.mxu0 %v659
    %903 = vmatpush.bf16.msra.mxu0 %v651
    %904 = vmatpush.bf16.msra.mxu0 %v643
    %905 = vmatpush.bf16.msra.mxu0 %v635
    %906 = vmatpush.bf16.msra.mxu0 %v627
    %907 = vmatpush.bf16.msra.mxu0 %v619
    %908 = vmatmul.bf16.gmra.mxu0 %v230
    %v909 = vpop.f32.mrf.mxu0
    %v910 = vadd.f32 0.0, %v909
    %v911 = vpop.f32.mrf.mxu0
    %912 = vdwg.mxu0
    %913 = vmatpush.bf16.msra.mxu0 %v739
    %914 = vmatpush.bf16.msra.mxu0 %v731
    %915 = vmatpush.bf16.msra.mxu0 %v723
    %916 = vmatpush.bf16.msra.mxu0 %v715
    %917 = vmatpush.bf16.msra.mxu0 %v707
    %918 = vmatpush.bf16.msra.mxu0 %v699
    %919 = vmatpush.bf16.msra.mxu0 %v691
    %920 = vmatpush.bf16.msra.mxu0 %v683
    %921 = vmatmul.bf16.gmra.mxu0 %v231
    %v922 = vpop.f32.mrf.mxu0
    %v923 = vadd.f32 %v910, %v922
    %v924 = vpop.f32.mrf.mxu0
    %925 = vdwg.mxu0
    %926 = vmatpush.bf16.msra.mxu0 %v676
    %927 = vmatpush.bf16.msra.mxu0 %v668
    %928 = vmatpush.bf16.msra.mxu0 %v660
    %929 = vmatpush.bf16.msra.mxu0 %v652
    %930 = vmatpush.bf16.msra.mxu0 %v644
    %931 = vmatpush.bf16.msra.mxu0 %v636
    %932 = vmatpush.bf16.msra.mxu0 %v628
    %933 = vmatpush.bf16.msra.mxu0 %v620
    %934 = vmatmul.bf16.gmra.mxu0 %v230
    %v935 = vpop.f32.mrf.mxu0
    %v936 = vadd.f32 0.0, %v935
    %v937 = vpop.f32.mrf.mxu0
    %938 = vdwg.mxu0
    %939 = vmatpush.bf16.msra.mxu0 %v740
    %940 = vmatpush.bf16.msra.mxu0 %v732
    %941 = vmatpush.bf16.msra.mxu0 %v724
    %942 = vmatpush.bf16.msra.mxu0 %v716
    %943 = vmatpush.bf16.msra.mxu0 %v708
    %944 = vmatpush.bf16.msra.mxu0 %v700
    %945 = vmatpush.bf16.msra.mxu0 %v692
    %946 = vmatpush.bf16.msra.mxu0 %v684
    %947 = vmatmul.bf16.gmra.mxu0 %v231
    %v948 = vpop.f32.mrf.mxu0
    %v949 = vadd.f32 %v936, %v948
    %v950 = vpop.f32.mrf.mxu0
    %951 = vdwg.mxu0
    %952 = vmatpush.bf16.msra.mxu0 %v677
    %953 = vmatpush.bf16.msra.mxu0 %v669
    %954 = vmatpush.bf16.msra.mxu0 %v661
    %955 = vmatpush.bf16.msra.mxu0 %v653
    %956 = vmatpush.bf16.msra.mxu0 %v645
    %957 = vmatpush.bf16.msra.mxu0 %v637
    %958 = vmatpush.bf16.msra.mxu0 %v629
    %959 = vmatpush.bf16.msra.mxu0 %v621
    %960 = vmatmul.bf16.gmra.mxu0 %v230
    %v961 = vpop.f32.mrf.mxu0
    %v962 = vadd.f32 0.0, %v961
    %v963 = vpop.f32.mrf.mxu0
    %964 = vdwg.mxu0
    %965 = vmatpush.bf16.msra.mxu0 %v741
    %966 = vmatpush.bf16.msra.mxu0 %v733
    %967 = vmatpush.bf16.msra.mxu0 %v725
    %968 = vmatpush.bf16.msra.mxu0 %v717
    %969 = vmatpush.bf16.msra.mxu0 %v709
    %970 = vmatpush.bf16.msra.mxu0 %v701
    %971 = vmatpush.bf16.msra.mxu0 %v693
    %972 = vmatpush.bf16.msra.mxu0 %v685
    %973 = vmatmul.bf16.gmra.mxu0 %v231
    %v974 = vpop.f32.mrf.mxu0
    %v975 = vadd.f32 %v962, %v974
    %v976 = vpop.f32.mrf.mxu0
    %977 = vdwg.mxu0
    %978 = vmatpush.bf16.msra.mxu0 %v678
    %979 = vmatpush.bf16.msra.mxu0 %v670
    %980 = vmatpush.bf16.msra.mxu0 %v662
    %981 = vmatpush.bf16.msra.mxu0 %v654
    %982 = vmatpush.bf16.msra.mxu0 %v646
    %983 = vmatpush.bf16.msra.mxu0 %v638
    %984 = vmatpush.bf16.msra.mxu0 %v630
    %985 = vmatpush.bf16.msra.mxu0 %v622
    %986 = vmatmul.bf16.gmra.mxu0 %v230
    %v987 = vpop.f32.mrf.mxu0
    %v988 = vadd.f32 0.0, %v987
    %v989 = vpop.f32.mrf.mxu0
    %990 = vdwg.mxu0
    %991 = vmatpush.bf16.msra.mxu0 %v742
    %992 = vmatpush.bf16.msra.mxu0 %v734
    %993 = vmatpush.bf16.msra.mxu0 %v726
    %994 = vmatpush.bf16.msra.mxu0 %v718
    %995 = vmatpush.bf16.msra.mxu0 %v710
    %996 = vmatpush.bf16.msra.mxu0 %v702
    %997 = vmatpush.bf16.msra.mxu0 %v694
    %998 = vmatpush.bf16.msra.mxu0 %v686
    %999 = vmatmul.bf16.gmra.mxu0 %v231
    %v1000 = vpop.f32.mrf.mxu0
    %v1001 = vadd.f32 %v988, %v1000
    %v1002 = vpop.f32.mrf.mxu0
    %1003 = vdwg.mxu0
    %1004 = vmatpush.bf16.msra.mxu0 %v679
    %1005 = vmatpush.bf16.msra.mxu0 %v671
    %1006 = vmatpush.bf16.msra.mxu0 %v663
    %1007 = vmatpush.bf16.msra.mxu0 %v655
    %1008 = vmatpush.bf16.msra.mxu0 %v647
    %1009 = vmatpush.bf16.msra.mxu0 %v639
    %1010 = vmatpush.bf16.msra.mxu0 %v631
    %1011 = vmatpush.bf16.msra.mxu0 %v623
    %1012 = vmatmul.bf16.gmra.mxu0 %v230
    %v1013 = vpop.f32.mrf.mxu0
    %v1014 = vadd.f32 0.0, %v1013
    %v1015 = vpop.f32.mrf.mxu0
    %1016 = vdwg.mxu0
    %1017 = vmatpush.bf16.msra.mxu0 %v743
    %1018 = vmatpush.bf16.msra.mxu0 %v735
    %1019 = vmatpush.bf16.msra.mxu0 %v727
    %1020 = vmatpush.bf16.msra.mxu0 %v719
    %1021 = vmatpush.bf16.msra.mxu0 %v711
    %1022 = vmatpush.bf16.msra.mxu0 %v703
    %1023 = vmatpush.bf16.msra.mxu0 %v695
    %1024 = vmatpush.bf16.msra.mxu0 %v687
    %1025 = vmatmul.bf16.gmra.mxu0 %v231
    %v1026 = vpop.f32.mrf.mxu0
    %v1027 = vadd.f32 %v1014, %v1026
    %v1028 = vpop.f32.mrf.mxu0
    %1029 = vdwg.mxu0
    %1030 = vmatpush.bf16.msra.mxu0 %v680
    %1031 = vmatpush.bf16.msra.mxu0 %v672
    %1032 = vmatpush.bf16.msra.mxu0 %v664
    %1033 = vmatpush.bf16.msra.mxu0 %v656
    %1034 = vmatpush.bf16.msra.mxu0 %v648
    %1035 = vmatpush.bf16.msra.mxu0 %v640
    %1036 = vmatpush.bf16.msra.mxu0 %v632
    %1037 = vmatpush.bf16.msra.mxu0 %v624
    %1038 = vmatmul.bf16.gmra.mxu0 %v230
    %v1039 = vpop.f32.mrf.mxu0
    %v1040 = vadd.f32 0.0, %v1039
    %v1041 = vpop.f32.mrf.mxu0
    %1042 = vdwg.mxu0
    %1043 = vmatpush.bf16.msra.mxu0 %v744
    %1044 = vmatpush.bf16.msra.mxu0 %v736
    %1045 = vmatpush.bf16.msra.mxu0 %v728
    %1046 = vmatpush.bf16.msra.mxu0 %v720
    %1047 = vmatpush.bf16.msra.mxu0 %v712
    %1048 = vmatpush.bf16.msra.mxu0 %v704
    %1049 = vmatpush.bf16.msra.mxu0 %v696
    %1050 = vmatpush.bf16.msra.mxu0 %v688
    %1051 = vmatmul.bf16.gmra.mxu0 %v231
    %v1052 = vpop.f32.mrf.mxu0
    %v1053 = vadd.f32 %v1040, %v1052
    %v1054 = vpop.f32.mrf.mxu0
    %1055 = vdwg.mxu0
    %1056 = vmatpush.bf16.msra.mxu0 %v681
    %1057 = vmatpush.bf16.msra.mxu0 %v673
    %1058 = vmatpush.bf16.msra.mxu0 %v665
    %1059 = vmatpush.bf16.msra.mxu0 %v657
    %1060 = vmatpush.bf16.msra.mxu0 %v649
    %1061 = vmatpush.bf16.msra.mxu0 %v641
    %1062 = vmatpush.bf16.msra.mxu0 %v633
    %1063 = vmatpush.bf16.msra.mxu0 %v625
    %1064 = vmatmul.bf16.gmra.mxu0 %v230
    %v1065 = vpop.f32.mrf.mxu0
    %v1066 = vadd.f32 0.0, %v1065
    %v1067 = vpop.f32.mrf.mxu0
    %1068 = vdwg.mxu0
    %1069 = vmatpush.bf16.msra.mxu0 %v745
    %1070 = vmatpush.bf16.msra.mxu0 %v737
    %1071 = vmatpush.bf16.msra.mxu0 %v729
    %1072 = vmatpush.bf16.msra.mxu0 %v721
    %1073 = vmatpush.bf16.msra.mxu0 %v713
    %1074 = vmatpush.bf16.msra.mxu0 %v705
    %1075 = vmatpush.bf16.msra.mxu0 %v697
    %1076 = vmatpush.bf16.msra.mxu0 %v689
    %1077 = vmatmul.bf16.gmra.mxu0 %v231
    %v1078 = vpop.f32.mrf.mxu0
    %v1079 = vadd.f32 %v1066, %v1078
    %v1080 = vpop.f32.mrf.mxu0
    %1081 = vdwg.mxu0
    %v1082 = vmax.f32 %v897, %v949
    %v1083 = vmax.f32 %v923, %v975
    %v1084 = vmax.f32 %v1082, %v1001
    %v1085 = vmax.f32 %v1083, %v1027
    %v1086 = vmax.f32 %v1084, %v1053
    %v1087 = vmax.f32 %v1085, %v1079
    %v1088 = vld [vmem:[%s3] sm:$0x3]
    %v1090 = vperm.slane %v1088, 0
    %v1091 = vperm.slane %v1088, 1
    %v1094 = vadd.f32 %v1086, %v1090
    %v1095 = vadd.f32 %v1087, %v1091
    %v1096 = vpack.c.bf16 %v1094, %v1094
    %v1097 = vpack.c.bf16 %v1095, %v1095
    %v1098 = vld [vmem:[#allocation4] sm:$0xff]
    %v1099 = vld [vmem:[#allocation4 + $0x8] sm:$0xff]
    %v1100 = vld [vmem:[#allocation4 + $0x10] sm:$0xff]
    %v1101 = vld [vmem:[#allocation4 + $0x18] sm:$0xff]
    %v1102 = vld [vmem:[#allocation4 + $0x20] sm:$0xff]
    %v1103 = vld [vmem:[#allocation4 + $0x28] sm:$0xff]
    %v1104 = vld [vmem:[#allocation4 + $0x30] sm:$0xff]
    %v1105 = vld [vmem:[#allocation4 + $0x38] sm:$0xff]
    %v1106 = vld [vmem:[#allocation4 + $0x40] sm:$0xff]
    %v1107 = vld [vmem:[#allocation4 + $0x48] sm:$0xff]
    %v1108 = vld [vmem:[#allocation4 + $0x50] sm:$0xff]
    %v1109 = vld [vmem:[#allocation4 + $0x58] sm:$0xff]
    %v1110 = vld [vmem:[#allocation4 + $0x60] sm:$0xff]
    %v1111 = vld [vmem:[#allocation4 + $0x68] sm:$0xff]
    %v1112 = vld [vmem:[#allocation4 + $0x70] sm:$0xff]
    %v1113 = vld [vmem:[#allocation4 + $0x78] sm:$0xff]
    %v1114 = vld [vmem:[#allocation4 + $0x80] sm:$0xff]
    %v1115 = vld [vmem:[#allocation4 + $0x88] sm:$0xff]
    %v1116 = vld [vmem:[#allocation4 + $0x90] sm:$0xff]
    %v1117 = vld [vmem:[#allocation4 + $0x98] sm:$0xff]
    %v1118 = vld [vmem:[#allocation4 + $0xa0] sm:$0xff]
    %v1119 = vld [vmem:[#allocation4 + $0xa8] sm:$0xff]
    %v1120 = vld [vmem:[#allocation4 + $0xb0] sm:$0xff]
    %v1121 = vld [vmem:[#allocation4 + $0xb8] sm:$0xff]
    %v1122 = vld [vmem:[#allocation4 + $0xc0] sm:$0xff]
    %v1123 = vld [vmem:[#allocation4 + $0xc8] sm:$0xff]
    %v1124 = vld [vmem:[#allocation4 + $0xd0] sm:$0xff]
    %v1125 = vld [vmem:[#allocation4 + $0xd8] sm:$0xff]
    %v1126 = vld [vmem:[#allocation4 + $0xe0] sm:$0xff]
    %v1127 = vld [vmem:[#allocation4 + $0xe8] sm:$0xff]
    %v1128 = vld [vmem:[#allocation4 + $0xf0] sm:$0xff]
    %v1129 = vld [vmem:[#allocation4 + $0xf8] sm:$0xff]
    %v1130 = vld [vmem:[#allocation4 + $0x100] sm:$0xff]
    %v1131 = vld [vmem:[#allocation4 + $0x108] sm:$0xff]
    %v1132 = vld [vmem:[#allocation4 + $0x110] sm:$0xff]
    %v1133 = vld [vmem:[#allocation4 + $0x118] sm:$0xff]
    %v1134 = vld [vmem:[#allocation4 + $0x120] sm:$0xff]
    %v1135 = vld [vmem:[#allocation4 + $0x128] sm:$0xff]
    %v1136 = vld [vmem:[#allocation4 + $0x130] sm:$0xff]
    %v1137 = vld [vmem:[#allocation4 + $0x138] sm:$0xff]
    %v1138 = vld [vmem:[#allocation4 + $0x140] sm:$0xff]
    %v1139 = vld [vmem:[#allocation4 + $0x148] sm:$0xff]
    %v1140 = vld [vmem:[#allocation4 + $0x150] sm:$0xff]
    %v1141 = vld [vmem:[#allocation4 + $0x158] sm:$0xff]
    %v1142 = vld [vmem:[#allocation4 + $0x160] sm:$0xff]
    %v1143 = vld [vmem:[#allocation4 + $0x168] sm:$0xff]
    %v1144 = vld [vmem:[#allocation4 + $0x170] sm:$0xff]
    %v1145 = vld [vmem:[#allocation4 + $0x178] sm:$0xff]
    %v1146 = vld [vmem:[#allocation4 + $0x180] sm:$0xff]
    %v1147 = vld [vmem:[#allocation4 + $0x188] sm:$0xff]
    %v1148 = vld [vmem:[#allocation4 + $0x190] sm:$0xff]
    %v1149 = vld [vmem:[#allocation4 + $0x198] sm:$0xff]
    %v1150 = vld [vmem:[#allocation4 + $0x1a0] sm:$0xff]
    %v1151 = vld [vmem:[#allocation4 + $0x1a8] sm:$0xff]
    %v1152 = vld [vmem:[#allocation4 + $0x1b0] sm:$0xff]
    %v1153 = vld [vmem:[#allocation4 + $0x1b8] sm:$0xff]
    %v1154 = vld [vmem:[#allocation4 + $0x1c0] sm:$0xff]
    %v1155 = vld [vmem:[#allocation4 + $0x1c8] sm:$0xff]
    %v1156 = vld [vmem:[#allocation4 + $0x1d0] sm:$0xff]
    %v1157 = vld [vmem:[#allocation4 + $0x1d8] sm:$0xff]
    %v1158 = vld [vmem:[#allocation4 + $0x1e0] sm:$0xff]
    %v1159 = vld [vmem:[#allocation4 + $0x1e8] sm:$0xff]
    %v1160 = vld [vmem:[#allocation4 + $0x1f0] sm:$0xff]
    %v1161 = vld [vmem:[#allocation4 + $0x1f8] sm:$0xff]
    %v1226 = vunpack.c.l.b16 %v1098
    %v1227 = vunpack.c.h.b16 %v1098
    %v1228 = vunpack.c.l.b16 %v1099
    %v1229 = vunpack.c.h.b16 %v1099
    %v1230 = vunpack.c.l.b16 %v1100
    %v1231 = vunpack.c.h.b16 %v1100
    %v1232 = vunpack.c.l.b16 %v1101
    %v1233 = vunpack.c.h.b16 %v1101
    %v1234 = vunpack.c.l.b16 %v1102
    %v1235 = vunpack.c.h.b16 %v1102
    %v1236 = vunpack.c.l.b16 %v1103
    %v1237 = vunpack.c.h.b16 %v1103
    %v1238 = vunpack.c.l.b16 %v1104
    %v1239 = vunpack.c.h.b16 %v1104
    %v1240 = vunpack.c.l.b16 %v1105
    %v1241 = vunpack.c.h.b16 %v1105
    %v1242 = vunpack.c.l.b16 %v1106
    %v1243 = vunpack.c.h.b16 %v1106
    %v1244 = vunpack.c.l.b16 %v1107
    %v1245 = vunpack.c.h.b16 %v1107
    %v1246 = vunpack.c.l.b16 %v1108
    %v1247 = vunpack.c.h.b16 %v1108
    %v1248 = vunpack.c.l.b16 %v1109
    %v1249 = vunpack.c.h.b16 %v1109
    %v1250 = vunpack.c.l.b16 %v1110
    %v1251 = vunpack.c.h.b16 %v1110
    %v1252 = vunpack.c.l.b16 %v1111
    %v1253 = vunpack.c.h.b16 %v1111
    %v1254 = vunpack.c.l.b16 %v1112
    %v1255 = vunpack.c.h.b16 %v1112
    %v1256 = vunpack.c.l.b16 %v1113
    %v1257 = vunpack.c.h.b16 %v1113
    %v1258 = vunpack.c.l.b16 %v1114
    %v1259 = vunpack.c.h.b16 %v1114
    %v1260 = vunpack.c.l.b16 %v1115
    %v1261 = vunpack.c.h.b16 %v1115
    %v1262 = vunpack.c.l.b16 %v1116
    %v1263 = vunpack.c.h.b16 %v1116
    %v1264 = vunpack.c.l.b16 %v1117
    %v1265 = vunpack.c.h.b16 %v1117
    %v1266 = vunpack.c.l.b16 %v1118
    %v1267 = vunpack.c.h.b16 %v1118
    %v1268 = vunpack.c.l.b16 %v1119
    %v1269 = vunpack.c.h.b16 %v1119
    %v1270 = vunpack.c.l.b16 %v1120
    %v1271 = vunpack.c.h.b16 %v1120
    %v1272 = vunpack.c.l.b16 %v1121
    %v1273 = vunpack.c.h.b16 %v1121
    %v1274 = vunpack.c.l.b16 %v1122
    %v1275 = vunpack.c.h.b16 %v1122
    %v1276 = vunpack.c.l.b16 %v1123
    %v1277 = vunpack.c.h.b16 %v1123
    %v1278 = vunpack.c.l.b16 %v1124
    %v1279 = vunpack.c.h.b16 %v1124
    %v1280 = vunpack.c.l.b16 %v1125
    %v1281 = vunpack.c.h.b16 %v1125
    %v1282 = vunpack.c.l.b16 %v1126
    %v1283 = vunpack.c.h.b16 %v1126
    %v1284 = vunpack.c.l.b16 %v1127
    %v1285 = vunpack.c.h.b16 %v1127
    %v1286 = vunpack.c.l.b16 %v1128
    %v1287 = vunpack.c.h.b16 %v1128
    %v1288 = vunpack.c.l.b16 %v1129
    %v1289 = vunpack.c.h.b16 %v1129
    %v1290 = vunpack.c.l.b16 %v1130
    %v1291 = vunpack.c.h.b16 %v1130
    %v1292 = vunpack.c.l.b16 %v1131
    %v1293 = vunpack.c.h.b16 %v1131
    %v1294 = vunpack.c.l.b16 %v1132
    %v1295 = vunpack.c.h.b16 %v1132
    %v1296 = vunpack.c.l.b16 %v1133
    %v1297 = vunpack.c.h.b16 %v1133
    %v1298 = vunpack.c.l.b16 %v1134
    %v1299 = vunpack.c.h.b16 %v1134
    %v1300 = vunpack.c.l.b16 %v1135
    %v1301 = vunpack.c.h.b16 %v1135
    %v1302 = vunpack.c.l.b16 %v1136
    %v1303 = vunpack.c.h.b16 %v1136
    %v1304 = vunpack.c.l.b16 %v1137
    %v1305 = vunpack.c.h.b16 %v1137
    %v1306 = vunpack.c.l.b16 %v1138
    %v1307 = vunpack.c.h.b16 %v1138
    %v1308 = vunpack.c.l.b16 %v1139
    %v1309 = vunpack.c.h.b16 %v1139
    %v1310 = vunpack.c.l.b16 %v1140
    %v1311 = vunpack.c.h.b16 %v1140
    %v1312 = vunpack.c.l.b16 %v1141
    %v1313 = vunpack.c.h.b16 %v1141
    %v1314 = vunpack.c.l.b16 %v1142
    %v1315 = vunpack.c.h.b16 %v1142
    %v1316 = vunpack.c.l.b16 %v1143
    %v1317 = vunpack.c.h.b16 %v1143
    %v1318 = vunpack.c.l.b16 %v1144
    %v1319 = vunpack.c.h.b16 %v1144
    %v1320 = vunpack.c.l.b16 %v1145
    %v1321 = vunpack.c.h.b16 %v1145
    %v1322 = vunpack.c.l.b16 %v1146
    %v1323 = vunpack.c.h.b16 %v1146
    %v1324 = vunpack.c.l.b16 %v1147
    %v1325 = vunpack.c.h.b16 %v1147
    %v1326 = vunpack.c.l.b16 %v1148
    %v1327 = vunpack.c.h.b16 %v1148
    %v1328 = vunpack.c.l.b16 %v1149
    %v1329 = vunpack.c.h.b16 %v1149
    %v1330 = vunpack.c.l.b16 %v1150
    %v1331 = vunpack.c.h.b16 %v1150
    %v1332 = vunpack.c.l.b16 %v1151
    %v1333 = vunpack.c.h.b16 %v1151
    %v1334 = vunpack.c.l.b16 %v1152
    %v1335 = vunpack.c.h.b16 %v1152
    %v1336 = vunpack.c.l.b16 %v1153
    %v1337 = vunpack.c.h.b16 %v1153
    %v1338 = vunpack.c.l.b16 %v1154
    %v1339 = vunpack.c.h.b16 %v1154
    %v1340 = vunpack.c.l.b16 %v1155
    %v1341 = vunpack.c.h.b16 %v1155
    %v1342 = vunpack.c.l.b16 %v1156
    %v1343 = vunpack.c.h.b16 %v1156
    %v1344 = vunpack.c.l.b16 %v1157
    %v1345 = vunpack.c.h.b16 %v1157
    %v1346 = vunpack.c.l.b16 %v1158
    %v1347 = vunpack.c.h.b16 %v1158
    %v1348 = vunpack.c.l.b16 %v1159
    %v1349 = vunpack.c.h.b16 %v1159
    %v1350 = vunpack.c.l.b16 %v1160
    %v1351 = vunpack.c.h.b16 %v1160
    %v1352 = vunpack.c.l.b16 %v1161
    %v1353 = vunpack.c.h.b16 %v1161
    %v1354 = vpack.c.b16 %v1230, %v1226
    %v1355 = vpack.c.b16 %v1231, %v1227
    %v1356 = vpack.c.b16 %v1232, %v1228
    %v1357 = vpack.c.b16 %v1233, %v1229
    %v1358 = vpack.c.b16 %v1238, %v1234
    %v1359 = vpack.c.b16 %v1239, %v1235
    %v1360 = vpack.c.b16 %v1240, %v1236
    %v1361 = vpack.c.b16 %v1241, %v1237
    %v1362 = vpack.c.b16 %v1246, %v1242
    %v1363 = vpack.c.b16 %v1247, %v1243
    %v1364 = vpack.c.b16 %v1248, %v1244
    %v1365 = vpack.c.b16 %v1249, %v1245
    %v1366 = vpack.c.b16 %v1254, %v1250
    %v1367 = vpack.c.b16 %v1255, %v1251
    %v1368 = vpack.c.b16 %v1256, %v1252
    %v1369 = vpack.c.b16 %v1257, %v1253
    %v1370 = vpack.c.b16 %v1262, %v1258
    %v1371 = vpack.c.b16 %v1263, %v1259
    %v1372 = vpack.c.b16 %v1264, %v1260
    %v1373 = vpack.c.b16 %v1265, %v1261
    %v1374 = vpack.c.b16 %v1270, %v1266
    %v1375 = vpack.c.b16 %v1271, %v1267
    %v1376 = vpack.c.b16 %v1272, %v1268
    %v1377 = vpack.c.b16 %v1273, %v1269
    %v1378 = vpack.c.b16 %v1278, %v1274
    %v1379 = vpack.c.b16 %v1279, %v1275
    %v1380 = vpack.c.b16 %v1280, %v1276
    %v1381 = vpack.c.b16 %v1281, %v1277
    %v1382 = vpack.c.b16 %v1286, %v1282
    %v1383 = vpack.c.b16 %v1287, %v1283
    %v1384 = vpack.c.b16 %v1288, %v1284
    %v1385 = vpack.c.b16 %v1289, %v1285
    %v1386 = vpack.c.b16 %v1294, %v1290
    %v1387 = vpack.c.b16 %v1295, %v1291
    %v1388 = vpack.c.b16 %v1296, %v1292
    %v1389 = vpack.c.b16 %v1297, %v1293
    %v1390 = vpack.c.b16 %v1302, %v1298
    %v1391 = vpack.c.b16 %v1303, %v1299
    %v1392 = vpack.c.b16 %v1304, %v1300
    %v1393 = vpack.c.b16 %v1305, %v1301
    %v1394 = vpack.c.b16 %v1310, %v1306
    %v1395 = vpack.c.b16 %v1311, %v1307
    %v1396 = vpack.c.b16 %v1312, %v1308
    %v1397 = vpack.c.b16 %v1313, %v1309
    %v1398 = vpack.c.b16 %v1318, %v1314
    %v1399 = vpack.c.b16 %v1319, %v1315
    %v1400 = vpack.c.b16 %v1320, %v1316
    %v1401 = vpack.c.b16 %v1321, %v1317
    %v1402 = vpack.c.b16 %v1326, %v1322
    %v1403 = vpack.c.b16 %v1327, %v1323
    %v1404 = vpack.c.b16 %v1328, %v1324
    %v1405 = vpack.c.b16 %v1329, %v1325
    %v1406 = vpack.c.b16 %v1334, %v1330
    %v1407 = vpack.c.b16 %v1335, %v1331
    %v1408 = vpack.c.b16 %v1336, %v1332
    %v1409 = vpack.c.b16 %v1337, %v1333
    %v1410 = vpack.c.b16 %v1342, %v1338
    %v1411 = vpack.c.b16 %v1343, %v1339
    %v1412 = vpack.c.b16 %v1344, %v1340
    %v1413 = vpack.c.b16 %v1345, %v1341
    %v1414 = vpack.c.b16 %v1350, %v1346
    %v1415 = vpack.c.b16 %v1351, %v1347
    %v1416 = vpack.c.b16 %v1352, %v1348
    %v1417 = vpack.c.b16 %v1353, %v1349
    %1482 = vmatpush.bf16.msra.mxu0 %v1382
    %1483 = vmatpush.bf16.msra.mxu0 %v1378
    %1484 = vmatpush.bf16.msra.mxu0 %v1374
    %1485 = vmatpush.bf16.msra.mxu0 %v1370
    %1486 = vmatpush.bf16.msra.mxu0 %v1366
    %1487 = vmatpush.bf16.msra.mxu0 %v1362
    %1488 = vmatpush.bf16.msra.mxu0 %v1358
    %1489 = vmatpush.bf16.msra.mxu0 %v1354
    %1490 = vmatmul.bf16.gmra.mxu0 %v1096
    %v1491 = vpop.f32.mrf.mxu0
    %v1492 = vadd.f32 0.0, %v1491
    %v1493 = vpop.f32.mrf.mxu0
    %1494 = vdwg.mxu0
    %1495 = vmatpush.bf16.msra.mxu0 %v1414
    %1496 = vmatpush.bf16.msra.mxu0 %v1410
    %1497 = vmatpush.bf16.msra.mxu0 %v1406
    %1498 = vmatpush.bf16.msra.mxu0 %v1402
    %1499 = vmatpush.bf16.msra.mxu0 %v1398
    %1500 = vmatpush.bf16.msra.mxu0 %v1394
    %1501 = vmatpush.bf16.msra.mxu0 %v1390
    %1502 = vmatpush.bf16.msra.mxu0 %v1386
    %1503 = vmatmul.bf16.gmra.mxu0 %v1097
    %v1504 = vpop.f32.mrf.mxu0
    %v1505 = vadd.f32 %v1492, %v1504
    %v1506 = vpop.f32.mrf.mxu0
    %1507 = vdwg.mxu0
    %1508 = vmatpush.bf16.msra.mxu0 %v1383
    %1509 = vmatpush.bf16.msra.mxu0 %v1379
    %1510 = vmatpush.bf16.msra.mxu0 %v1375
    %1511 = vmatpush.bf16.msra.mxu0 %v1371
    %1512 = vmatpush.bf16.msra.mxu0 %v1367
    %1513 = vmatpush.bf16.msra.mxu0 %v1363
    %1514 = vmatpush.bf16.msra.mxu0 %v1359
    %1515 = vmatpush.bf16.msra.mxu0 %v1355
    %1516 = vmatmul.bf16.gmra.mxu0 %v1096
    %v1517 = vpop.f32.mrf.mxu0
    %v1518 = vadd.f32 0.0, %v1517
    %v1519 = vpop.f32.mrf.mxu0
    %1520 = vdwg.mxu0
    %1521 = vmatpush.bf16.msra.mxu0 %v1415
    %1522 = vmatpush.bf16.msra.mxu0 %v1411
    %1523 = vmatpush.bf16.msra.mxu0 %v1407
    %1524 = vmatpush.bf16.msra.mxu0 %v1403
    %1525 = vmatpush.bf16.msra.mxu0 %v1399
    %1526 = vmatpush.bf16.msra.mxu0 %v1395
    %1527 = vmatpush.bf16.msra.mxu0 %v1391
    %1528 = vmatpush.bf16.msra.mxu0 %v1387
    %1529 = vmatmul.bf16.gmra.mxu0 %v1097
    %v1530 = vpop.f32.mrf.mxu0
    %v1531 = vadd.f32 %v1518, %v1530
    %v1532 = vpop.f32.mrf.mxu0
    %1533 = vdwg.mxu0
    %1534 = vmatpush.bf16.msra.mxu0 %v1384
    %1535 = vmatpush.bf16.msra.mxu0 %v1380
    %1536 = vmatpush.bf16.msra.mxu0 %v1376
    %1537 = vmatpush.bf16.msra.mxu0 %v1372
    %1538 = vmatpush.bf16.msra.mxu0 %v1368
    %1539 = vmatpush.bf16.msra.mxu0 %v1364
    %1540 = vmatpush.bf16.msra.mxu0 %v1360
    %1541 = vmatpush.bf16.msra.mxu0 %v1356
    %1542 = vmatmul.bf16.gmra.mxu0 %v1096
    %v1543 = vpop.f32.mrf.mxu0
    %v1544 = vadd.f32 0.0, %v1543
    %v1545 = vpop.f32.mrf.mxu0
    %1546 = vdwg.mxu0
    %1547 = vmatpush.bf16.msra.mxu0 %v1416
    %1548 = vmatpush.bf16.msra.mxu0 %v1412
    %1549 = vmatpush.bf16.msra.mxu0 %v1408
    %1550 = vmatpush.bf16.msra.mxu0 %v1404
    %1551 = vmatpush.bf16.msra.mxu0 %v1400
    %1552 = vmatpush.bf16.msra.mxu0 %v1396
    %1553 = vmatpush.bf16.msra.mxu0 %v1392
    %1554 = vmatpush.bf16.msra.mxu0 %v1388
    %1555 = vmatmul.bf16.gmra.mxu0 %v1097
    %v1556 = vpop.f32.mrf.mxu0
    %v1557 = vadd.f32 %v1544, %v1556
    %v1558 = vpop.f32.mrf.mxu0
    %1559 = vdwg.mxu0
    %1560 = vmatpush.bf16.msra.mxu0 %v1385
    %1561 = vmatpush.bf16.msra.mxu0 %v1381
    %1562 = vmatpush.bf16.msra.mxu0 %v1377
    %1563 = vmatpush.bf16.msra.mxu0 %v1373
    %1564 = vmatpush.bf16.msra.mxu0 %v1369
    %1565 = vmatpush.bf16.msra.mxu0 %v1365
    %1566 = vmatpush.bf16.msra.mxu0 %v1361
    %1567 = vmatpush.bf16.msra.mxu0 %v1357
    %1568 = vmatmul.bf16.gmra.mxu0 %v1096
    %v1569 = vpop.f32.mrf.mxu0
    %v1570 = vadd.f32 0.0, %v1569
    %v1571 = vpop.f32.mrf.mxu0
    %1572 = vdwg.mxu0
    %1573 = vmatpush.bf16.msra.mxu0 %v1417
    %1574 = vmatpush.bf16.msra.mxu0 %v1413
    %1575 = vmatpush.bf16.msra.mxu0 %v1409
    %1576 = vmatpush.bf16.msra.mxu0 %v1405
    %1577 = vmatpush.bf16.msra.mxu0 %v1401
    %1578 = vmatpush.bf16.msra.mxu0 %v1397
    %1579 = vmatpush.bf16.msra.mxu0 %v1393
    %1580 = vmatpush.bf16.msra.mxu0 %v1389
    %1581 = vmatmul.bf16.gmra.mxu0 %v1097
    %v1582 = vpop.f32.mrf.mxu0
    %v1583 = vadd.f32 %v1570, %v1582
    %v1584 = vpop.f32.mrf.mxu0
    %1585 = vdwg.mxu0
    %v1586 = vmax.f32 %v1505, %v1531
    %v1587 = vmax.f32 %v1586, %v1557
    %v1588 = vmax.f32 %v1587, %v1583
    %v1589 = vld [vmem:[%s5] sm:$0x1]
    %v1591 = vperm.slane %v1589, 0
    %v1593 = vadd.f32 %v1588, %v1591
    %v1594 = vpack.c.bf16 %v1593, %v1593
    %v1595 = vld [vmem:[#allocation6] sm:$0xf]
    %v1596 = vld [vmem:[#allocation6 + $0x4] sm:$0xf]
    %v1597 = vld [vmem:[#allocation6 + $0x8] sm:$0xf]
    %v1598 = vld [vmem:[#allocation6 + $0xc] sm:$0xf]
    %v1599 = vld [vmem:[#allocation6 + $0x10] sm:$0xf]
    %v1600 = vld [vmem:[#allocation6 + $0x14] sm:$0xf]
    %v1601 = vld [vmem:[#allocation6 + $0x18] sm:$0xf]
    %v1602 = vld [vmem:[#allocation6 + $0x1c] sm:$0xf]
    %v1603 = vld [vmem:[#allocation6 + $0x20] sm:$0xf]
    %v1604 = vld [vmem:[#allocation6 + $0x24] sm:$0xf]
    %v1605 = vld [vmem:[#allocation6 + $0x28] sm:$0xf]
    %v1606 = vld [vmem:[#allocation6 + $0x2c] sm:$0xf]
    %v1607 = vld [vmem:[#allocation6 + $0x30] sm:$0xf]
    %v1608 = vld [vmem:[#allocation6 + $0x34] sm:$0xf]
    %v1609 = vld [vmem:[#allocation6 + $0x38] sm:$0xf]
    %v1610 = vld [vmem:[#allocation6 + $0x3c] sm:$0xf]
    %v1611 = vld [vmem:[%s7] sm:$0x1]
    %v1613 = vperm.slane %v1611, 0
    %v1631 = vunpack.c.l.b16 %v1595
    %v1632 = vunpack.c.l.b16 %v1596
    %v1633 = vunpack.c.l.b16 %v1597
    %v1634 = vunpack.c.l.b16 %v1598
    %v1635 = vunpack.c.l.b16 %v1599
    %v1636 = vunpack.c.l.b16 %v1600
    %v1637 = vunpack.c.l.b16 %v1601
    %v1638 = vunpack.c.l.b16 %v1602
    %v1639 = vunpack.c.l.b16 %v1603
    %v1640 = vunpack.c.l.b16 %v1604
    %v1641 = vunpack.c.l.b16 %v1605
    %v1642 = vunpack.c.l.b16 %v1606
    %v1643 = vunpack.c.l.b16 %v1607
    %v1644 = vunpack.c.l.b16 %v1608
    %v1645 = vunpack.c.l.b16 %v1609
    %v1646 = vunpack.c.l.b16 %v1610
    %v1647 = vpack.c.b16 %v1632, %v1631
    %v1648 = vpack.c.b16 %v1634, %v1633
    %v1649 = vpack.c.b16 %v1636, %v1635
    %v1650 = vpack.c.b16 %v1638, %v1637
    %v1651 = vpack.c.b16 %v1640, %v1639
    %v1652 = vpack.c.b16 %v1642, %v1641
    %v1653 = vpack.c.b16 %v1644, %v1643
    %v1654 = vpack.c.b16 %v1646, %v1645
    %1663 = vmatpush.bf16.msra.mxu0 %v1654
    %1664 = vmatpush.bf16.msra.mxu0 %v1653
    %1665 = vmatpush.bf16.msra.mxu0 %v1652
    %1666 = vmatpush.bf16.msra.mxu0 %v1651
    %1667 = vmatpush.bf16.msra.mxu0 %v1650
    %1668 = vmatpush.bf16.msra.mxu0 %v1649
    %1669 = vmatpush.bf16.msra.mxu0 %v1648
    %1670 = vmatpush.bf16.msra.mxu0 %v1647
    %1671 = vmatmul.bf16.gmra.mxu0 %v1594
    %v1672 = vpop.f32.mrf.mxu0
    %v1673 = vadd.f32 %v1613, %v1672
    %v1674 = vpop.f32.mrf.mxu0
    %1675 = vdwg.mxu0
    %v1676 = vld [vmem:[%s1] sm:$0xff]
    %v1677 = vmul.f32 %v1673, %v1676
    %v1678 = vpack.c.bf16 %v1677, %v1677
    %v1679 = vld [vmem:[#allocation7] sm:$0xf]
    %v1680 = vld [vmem:[#allocation7 + $0x4] sm:$0xf]
    %v1681 = vld [vmem:[#allocation7 + $0x8] sm:$0xf]
    %v1682 = vld [vmem:[#allocation7 + $0xc] sm:$0xf]
    %v1683 = vld [vmem:[#allocation7 + $0x10] sm:$0xf]
    %v1684 = vld [vmem:[#allocation7 + $0x14] sm:$0xf]
    %v1685 = vld [vmem:[#allocation7 + $0x18] sm:$0xf]
    %v1686 = vld [vmem:[#allocation7 + $0x1c] sm:$0xf]
    %v1687 = vld [vmem:[#allocation7 + $0x20] sm:$0xf]
    %v1688 = vld [vmem:[#allocation7 + $0x24] sm:$0xf]
    %v1689 = vld [vmem:[#allocation7 + $0x28] sm:$0xf]
    %v1690 = vld [vmem:[#allocation7 + $0x2c] sm:$0xf]
    %v1691 = vld [vmem:[#allocation7 + $0x30] sm:$0xf]
    %v1692 = vld [vmem:[#allocation7 + $0x34] sm:$0xf]
    %v1693 = vld [vmem:[#allocation7 + $0x38] sm:$0xf]
    %v1694 = vld [vmem:[#allocation7 + $0x3c] sm:$0xf]
    %v1695 = vld [vmem:[%s9] sm:$0x1]
    %v1697 = vperm.slane %v1695, 0
    %v1715 = vunpack.c.l.b16 %v1679
    %v1716 = vunpack.c.l.b16 %v1680
    %v1717 = vunpack.c.l.b16 %v1681
    %v1718 = vunpack.c.l.b16 %v1682
    %v1719 = vunpack.c.l.b16 %v1683
    %v1720 = vunpack.c.l.b16 %v1684
    %v1721 = vunpack.c.l.b16 %v1685
    %v1722 = vunpack.c.l.b16 %v1686
    %v1723 = vunpack.c.l.b16 %v1687
    %v1724 = vunpack.c.l.b16 %v1688
    %v1725 = vunpack.c.l.b16 %v1689
    %v1726 = vunpack.c.l.b16 %v1690
    %v1727 = vunpack.c.l.b16 %v1691
    %v1728 = vunpack.c.l.b16 %v1692
    %v1729 = vunpack.c.l.b16 %v1693
    %v1730 = vunpack.c.l.b16 %v1694
    %v1731 = vpack.c.b16 %v1716, %v1715
    %v1732 = vpack.c.b16 %v1718, %v1717
    %v1733 = vpack.c.b16 %v1720, %v1719
    %v1734 = vpack.c.b16 %v1722, %v1721
    %v1735 = vpack.c.b16 %v1724, %v1723
    %v1736 = vpack.c.b16 %v1726, %v1725
    %v1737 = vpack.c.b16 %v1728, %v1727
    %v1738 = vpack.c.b16 %v1730, %v1729
    %1747 = vmatpush.bf16.msra.mxu0 %v1738
    %1748 = vmatpush.bf16.msra.mxu0 %v1737
    %1749 = vmatpush.bf16.msra.mxu0 %v1736
    %1750 = vmatpush.bf16.msra.mxu0 %v1735
    %1751 = vmatpush.bf16.msra.mxu0 %v1734
    %1752 = vmatpush.bf16.msra.mxu0 %v1733
    %1753 = vmatpush.bf16.msra.mxu0 %v1732
    %1754 = vmatpush.bf16.msra.mxu0 %v1731
    %1755 = vmatmul.bf16.gmra.mxu0 %v1678
    %v1756 = vpop.f32.mrf.mxu0
    %v1757 = vadd.f32 %v1697, %v1756
    %v1758 = vpop.f32.mrf.mxu0
    %1759 = vdwg.mxu0
    %1760 = vst [vmem:[%s10] sm:$0xff] %v1757
    // Predicated region
    $region58: #{net_forward.3} parent=1 // pred_check
      _
    $region59: #{net_forward.3} parent=1 // pred_check_branch
      %1762 = sbr.rel (0) target = $region61
    $region60: #{net_forward.3} parent=1 // pred_region
      _
    $region61: #{net_forward.3} parent=1 // pred_fallthru
      _
    // Predicated region
    $region62: #{net_forward.3} parent=1 // pred_check
      _
    $region63: #{net_forward.3} parent=1 // pred_check_branch
      %1764 = sbr.rel (0) target = $region65
    $region64: #{net_forward.3} parent=1 // pred_region
      _
    $region65: #{net_forward.3} parent=1 // pred_fallthru
      _
    %1765 = vsyncpa [#allocation3], 1
    %1766 = vsyncpa [#allocation5], 1
    %1767 = vsyncpa [#allocation8], 1

</llo_original>
